<compile_context>
chip_gen: v6e
topology: v6e:2x2x1
jax: 0.10.0
libtpu: 0.0.40
codegen_flags: <defaults>
</compile_context>

<pallas_src>
import functools

import jax
import jax.numpy as jnp
from jax import lax
from jax.experimental import pallas as pl
from jax.experimental.pallas import tpu as pltpu


def _round_up(x, m):
    return (x + m - 1) // m * m


def bottleneck_kernel(x_ref, w1_ref, b1_ref, w2_ref, b2_ref, w3_ref, b3_ref,
                      out_ref, pad_ref, *, H, W):
    # x_ref:   (Nb, H*W, Cin)        bf16
    # w1_ref:  (Cin, Cmid)           bf16 (BN1 scale folded in)
    # w2_ref:  (9, Cmid, Cmid)       bf16 (BN2 scale folded in; index = kh*3+kw)
    # w3_ref:  (Cmid, Cout)          bf16 (BN3 scale folded in)
    # b*_ref:  (1, C)                f32
    # out_ref: (Nb, H*W, Cout)       bf16
    # pad_ref: (Nb, H+2, Wp, Cmid)   bf16 scratch, Wp = round_up(W+2, 8)
    Nb, HW, Cin = x_ref.shape
    Cmid = w1_ref.shape[1]
    Cout = w3_ref.shape[1]
    M = Nb * HW

    x = x_ref[...].reshape(M, Cin)                       # bf16

    # --- conv1 (1x1) + bn1 (scale folded) + relu ---
    y1 = jnp.dot(x, w1_ref[...], preferred_element_type=jnp.float32)
    y1 = jnp.maximum(y1 + b1_ref[...], 0.0)              # (M, Cmid) f32

    # --- conv2 (3x3, stride 1, pad 1): 9 fp32-accumulated dots, no im2col ---
    # Interior of the padded scratch is fully overwritten every step; only the
    # 1-wide halo of the used (W+2)-wide region needs (re-)zeroing, keeping
    # this correct under "parallel" grid sharding.  Columns >= W+2 (alignment
    # padding) are never read, so they need no initialization.
    pad_ref[:, 1:H + 1, 1:W + 1, :] = (
        y1.reshape(Nb, H, W, Cmid).astype(pad_ref.dtype))
    zrow = jnp.zeros((Nb, 1, W + 2, Cmid), pad_ref.dtype)
    pad_ref[:, 0:1, 0:W + 2, :] = zrow
    pad_ref[:, H + 1:H + 2, 0:W + 2, :] = zrow
    zcol = jnp.zeros((Nb, H, 1, Cmid), pad_ref.dtype)
    pad_ref[:, 1:H + 1, 0:1, :] = zcol
    pad_ref[:, 1:H + 1, W + 1:W + 2, :] = zcol

    acc = None
    for kh in range(3):
        for kw in range(3):
            tap = pad_ref[:, kh:kh + H, kw:kw + W, :].reshape(M, Cmid)
            d = jnp.dot(tap, w2_ref[kh * 3 + kw],
                        preferred_element_type=jnp.float32)
            acc = d if acc is None else acc + d
    y2 = jnp.maximum(acc + b2_ref[...], 0.0)             # (M, Cmid) f32

    # --- conv3 (1x1) + bn3 (scale folded) ---
    y3 = jnp.dot(y2.astype(w3_ref.dtype), w3_ref[...],
                 preferred_element_type=jnp.float32)
    y3 = y3 + b3_ref[...]                                # (M, Cout) f32

    # --- identity shortcut (downsample=None, stride=1) + relu ---
    # Residual uses the bf16 kernel input; feed a separate fp32 residual
    # stream if tighter shortcut accuracy is ever required.
    out = jnp.maximum(y3 + x.astype(jnp.float32), 0.0)
    out_ref[...] = out.reshape(Nb, HW, Cout).astype(out_ref.dtype)


def _fold_bn(gamma, beta, mean, var, eps=1e-5):
    scale = gamma / jnp.sqrt(var + eps)
    bias = beta - mean * scale
    return scale, bias


def _vmem_limit_bytes():
    # ~75% of physical VMEM when queryable (v5e/v6e: 128 MiB -> ~96 MB,
    # v7x: 64 MiB/TC -> ~48 MB); 48 MB fallback is safe on all generations
    # and above the 16/32 MiB scoped defaults.
    try:
        cap = int(pltpu.get_tpu_info().vmem_capacity_bytes)
        return max(32 * 1024 * 1024, int(cap * 0.75))
    except Exception:
        return 48 * 1024 * 1024


def bottleneck_pallas_nhwc(x_nhwc, params, *, block_n=None, eps=1e-5,
                           out_dtype=jnp.bfloat16):
    """Fused Bottleneck forward.  x_nhwc: (N, H, W, Cin).
    params: PyTorch-layout conv weights + BN stats:
      w1:(Cmid,Cin,1,1)  w2:(Cmid,Cmid,3,3)  w3:(Cout,Cmid,1,1)
      bn1/bn2/bn3: (gamma, beta, running_mean, running_var)."""
    w1_t, w2_t, w3_t = params["w1"], params["w2"], params["w3"]
    N, H, W, Cin = x_nhwc.shape
    Cmid = w1_t.shape[0]
    Cout = w3_t.shape[0]
    assert Cin == Cout, "identity shortcut requires in_channels == out_channels*4"

    # Fold BN (inference form) into per-output-channel scale/bias, then fold
    # the scale into the conv weights (host-side, one time).
    s1, b1 = _fold_bn(*params["bn1"], eps)
    s2, b2 = _fold_bn(*params["bn2"], eps)
    s3, b3 = _fold_bn(*params["bn3"], eps)

    w1 = (jnp.transpose(w1_t[:, :, 0, 0], (1, 0)) * s1[None, :]).astype(jnp.bfloat16)
    w2 = (jnp.transpose(w2_t, (2, 3, 1, 0)) * s2[None, None, None, :]) \
        .reshape(9, Cmid, Cmid).astype(jnp.bfloat16)
    w3 = (jnp.transpose(w3_t[:, :, 0, 0], (1, 0)) * s3[None, :]).astype(jnp.bfloat16)
    b1 = b1[None, :].astype(jnp.float32)
    b2 = b2[None, :].astype(jnp.float32)
    b3 = b3[None, :].astype(jnp.float32)

    HW = H * W
    Wp = _round_up(W + 2, 8)
    vmem_limit = _vmem_limit_bytes()

    if block_n is None:
        # Per-image VMEM footprint: double-buffered bf16 x/out blocks, the bf16
        # padded scratch and fp32 y1/acc/y2/y3 temporaries.
        per_img = (2 * HW * Cin * 2 + 2 * HW * Cout * 2
                   + (H + 2) * Wp * Cmid * 2
                   + HW * (4 * Cmid * 4 + Cout * 4))
        cap = max(1, (vmem_limit // 2) // max(per_img, 1))
        max_bn = min(cap, N if N < 2 else N // 2)   # keep >= 2 grid steps
        block_n = max(d for d in range(1, max_bn + 1) if N % d == 0)
    assert N % block_n == 0

    x = x_nhwc.reshape(N, HW, Cin).astype(jnp.bfloat16)

    const2 = lambda i: (0, 0)
    const3 = lambda i: (0, 0, 0)
    kernel = functools.partial(bottleneck_kernel, H=H, W=W)

    # NOTE: weight/bias specs could be single-buffered (pipeline_mode=
    # pl.Buffered(1)) to reclaim a little VMEM; they are tiny, so left default.
    out_flat = pl.pallas_call(
        kernel,
        out_shape=jax.ShapeDtypeStruct((N, HW, Cout), out_dtype),
        grid_spec=pltpu.PrefetchScalarGridSpec(
            num_scalar_prefetch=0,
            grid=(N // block_n,),
            in_specs=[
                pl.BlockSpec((block_n, HW, Cin), lambda i: (i, 0, 0)),
                pl.BlockSpec((Cin, Cmid), const2),
                pl.BlockSpec((1, Cmid), const2),
                pl.BlockSpec((9, Cmid, Cmid), const3),
                pl.BlockSpec((1, Cmid), const2),
                pl.BlockSpec((Cmid, Cout), const2),
                pl.BlockSpec((1, Cout), const2),
            ],
            out_specs=pl.BlockSpec((block_n, HW, Cout), lambda i: (i, 0, 0)),
            scratch_shapes=[
                pltpu.VMEM((block_n, H + 2, Wp, Cmid), jnp.bfloat16),
            ],
        ),
        compiler_params=pltpu.CompilerParams(
            dimension_semantics=("parallel",),
            vmem_limit_bytes=vmem_limit),
    )(x, w1, b1, w2, b2, w3, b3)

    return out_flat.reshape(N, H, W, Cout)


def bottleneck_pallas(x_nchw, params, *, block_n=None, eps=1e-5):
    """NCHW adapter matching the PyTorch module layout.  Keep the surrounding
    network NHWC and call bottleneck_pallas_nhwc directly to avoid these two
    extra HBM relayout passes over the activation."""
    x_nhwc = jnp.transpose(x_nchw, (0, 2, 3, 1))
    out = bottleneck_pallas_nhwc(x_nhwc, params, block_n=block_n, eps=eps)
    return jnp.transpose(out, (0, 3, 1, 2))               # bf16, NCHW


# ---------------- pure-JAX reference (mirrors the PyTorch forward) ----------
def _bn(y, gamma, beta, mean, var, eps=1e-5):
    inv = gamma / jnp.sqrt(var + eps)
    return (y - mean[None, :, None, None]) * inv[None, :, None, None] \
        + beta[None, :, None, None]


def bottleneck_ref(x, p):
    dn = ("NCHW", "OIHW", "NCHW")
    conv = functools.partial(lax.conv_general_dilated,
                             window_strides=(1, 1), dimension_numbers=dn)
    y = conv(x, p["w1"], padding="VALID")
    y = jax.nn.relu(_bn(y, *p["bn1"]))
    y = conv(y, p["w2"], padding=((1, 1), (1, 1)))
    y = jax.nn.relu(_bn(y, *p["bn2"]))
    y = conv(y, p["w3"], padding="VALID")
    y = _bn(y, *p["bn3"])
    return jax.nn.relu(y + x)


if __name__ == "__main__":
    # Small shapes: out_channels=8, expansion=4 -> in_channels=32, 8x8 spatial.
    # (Tune block_n / formulation at production ResNet shapes, not these.)
    N, Cmid, H, W = 2, 8, 8, 8
    Cin = Cout = Cmid * 4                 # 32

    key = jax.random.PRNGKey(0)
    ks = jax.random.split(key, 16)

    x = jax.random.normal(ks[0], (N, Cin, H, W), jnp.float32)

    # PyTorch-layout conv weights (O, I, kh, kw), bias=False everywhere.
    w1_t = jax.random.normal(ks[1], (Cmid, Cin, 1, 1), jnp.float32) * 0.1
    w2_t = jax.random.normal(ks[2], (Cmid, Cmid, 3, 3), jnp.float32) * 0.1
    w3_t = jax.random.normal(ks[3], (Cout, Cmid, 1, 1), jnp.float32) * 0.1

    def bn_params(kg, kb, km, kv, c):
        gamma = jax.random.uniform(kg, (c,), jnp.float32, 0.5, 1.5)
        beta = jax.random.normal(kb, (c,), jnp.float32) * 0.1
        mean = jax.random.normal(km, (c,), jnp.float32) * 0.1
        var = jax.random.uniform(kv, (c,), jnp.float32, 0.5, 1.5)
        return gamma, beta, mean, var

    bn1 = bn_params(ks[4], ks[5], ks[6], ks[7], Cmid)
    bn2 = bn_params(ks[8], ks[9], ks[10], ks[11], Cmid)
    bn3 = bn_params(ks[12], ks[13], ks[14], ks[15], Cout)

    params = {"w1": w1_t, "w2": w2_t, "w3": w3_t,
              "bn1": bn1, "bn2": bn2, "bn3": bn3}

    out = bottleneck_pallas(x, params)            # auto block_n -> grid of 2
    out = jax.block_until_ready(out).astype(jnp.float32)

    ref = jax.block_until_ready(bottleneck_ref(x, params))

    # bf16 matmul inputs + bf16 output -> loosened tolerance vs fp32 reference.
    err = jnp.abs(out - ref)
    tol = 1e-1 + 1e-2 * jnp.abs(ref)
    if not bool(jnp.all(err <= tol)):
        raise AssertionError(
            f"Pallas bottleneck mismatch vs JAX reference "
            f"(max abs err {float(jnp.max(err)):.4e})")

    print("KERNEL_OK")
</pallas_src>

<mosaic_0001>
module attributes {stable_mosaic.version = 11 : i64} {
  func.func @bottleneck_kernel(%arg0: i32, %arg1: memref<1x64x32xbf16, #tpu.memory_space<vmem>>, %arg2: memref<32x8xbf16, #tpu.memory_space<vmem>>, %arg3: memref<1x8xf32, #tpu.memory_space<vmem>>, %arg4: memref<9x8x8xbf16, #tpu.memory_space<vmem>>, %arg5: memref<1x8xf32, #tpu.memory_space<vmem>>, %arg6: memref<8x32xbf16, #tpu.memory_space<vmem>>, %arg7: memref<1x32xf32, #tpu.memory_space<vmem>>, %arg8: memref<1x64x32xbf16, #tpu.memory_space<vmem>>, %arg9: memref<1x10x16x8xbf16, #tpu.memory_space<vmem>>) attributes {dimension_semantics = [#tpu.dimension_semantics<parallel>], iteration_bounds = array<i64: 2>, scalar_prefetch = 0 : i64, scratch_operands = 1 : i64, tpu.core_type = #tpu.core_type<tc>, window_params = [{transform_indices = @transform_0, window_bounds = array<i64: 1, 64, 32>}, {pipeline_mode = #tpu.pipeline_mode<synchronous>, transform_indices = @transform_1, window_bounds = array<i64: 32, 8>}, {pipeline_mode = #tpu.pipeline_mode<synchronous>, transform_indices = @transform_2, window_bounds = array<i64: 1, 8>}, {pipeline_mode = #tpu.pipeline_mode<synchronous>, transform_indices = @transform_3, window_bounds = array<i64: 9, 8, 8>}, {pipeline_mode = #tpu.pipeline_mode<synchronous>, transform_indices = @transform_4, window_bounds = array<i64: 1, 8>}, {pipeline_mode = #tpu.pipeline_mode<synchronous>, transform_indices = @transform_5, window_bounds = array<i64: 8, 32>}, {pipeline_mode = #tpu.pipeline_mode<synchronous>, transform_indices = @transform_6, window_bounds = array<i64: 1, 32>}, {transform_indices = @transform_7, window_bounds = array<i64: 1, 64, 32>}]} {
    %c0 = arith.constant 0 : index
    %c0_0 = arith.constant 0 : index
    %c0_1 = arith.constant 0 : index
    %0 = vector.load %arg1[%c0, %c0_0, %c0_1] : memref<1x64x32xbf16, #tpu.memory_space<vmem>>, vector<1x64x32xbf16>
    %1 = vector.shape_cast %0 : vector<1x64x32xbf16> to vector<64x32xbf16>
    %c0_2 = arith.constant 0 : index
    %c0_3 = arith.constant 0 : index
    %2 = vector.load %arg2[%c0_2, %c0_3] : memref<32x8xbf16, #tpu.memory_space<vmem>>, vector<32x8xbf16>
    %cst = arith.constant dense<0.000000e+00> : vector<64x8xf32>
    %3 = tpu.matmul %1, %2, %cst {dimension_numbers = #tpu.dot_dimension_numbers<[1], [0], [0], [1], [0, 0, 1, 1], [], []>} : vector<64x32xbf16>, vector<32x8xbf16>, vector<64x8xf32> -> vector<64x8xf32>
    %c0_4 = arith.constant 0 : index
    %c0_5 = arith.constant 0 : index
    %4 = vector.load %arg3[%c0_4, %c0_5] : memref<1x8xf32, #tpu.memory_space<vmem>>, vector<1x8xf32>
    %5 = vector.broadcast %4 : vector<1x8xf32> to vector<64x8xf32>
    %6 = arith.addf %3, %5 : vector<64x8xf32>
    %cst_6 = arith.constant 0.000000e+00 : f32
    %7 = vector.broadcast %cst_6 : f32 to vector<64x8xf32>
    %8 = arith.maximumf %6, %7 : vector<64x8xf32>
    %9 = vector.shape_cast %8 : vector<64x8xf32> to vector<1x8x8x8xf32>
    %10 = arith.truncf %9 : vector<1x8x8x8xf32> to vector<1x8x8x8xbf16>
    %c0_7 = arith.constant 0 : index
    %c1 = arith.constant 1 : index
    %c1_8 = arith.constant 1 : index
    %c0_9 = arith.constant 0 : index
    %11 = vector.load %arg9[%c0_7, %c1, %c1_8, %c0_9] : memref<1x10x16x8xbf16, #tpu.memory_space<vmem>>, vector<1x8x8x8xbf16>
    tpu.vector_store %arg9[%c0_7, %c1, %c1_8, %c0_9], %10 {strides = array<i32>} : memref<1x10x16x8xbf16, #tpu.memory_space<vmem>>, vector<1x8x8x8xbf16>,
    %cst_10 = arith.constant 0.000000e+00 : bf16
    %12 = vector.broadcast %cst_10 : bf16 to vector<1x1x10x8xbf16>
    %c0_11 = arith.constant 0 : index
    %c0_12 = arith.constant 0 : index
    %c0_13 = arith.constant 0 : index
    %c0_14 = arith.constant 0 : index
    %13 = vector.load %arg9[%c0_11, %c0_12, %c0_13, %c0_14] : memref<1x10x16x8xbf16, #tpu.memory_space<vmem>>, vector<1x1x10x8xbf16>
    tpu.vector_store %arg9[%c0_11, %c0_12, %c0_13, %c0_14], %12 {strides = array<i32>} : memref<1x10x16x8xbf16, #tpu.memory_space<vmem>>, vector<1x1x10x8xbf16>,
    %c0_15 = arith.constant 0 : index
    %c9 = arith.constant 9 : index
    %c0_16 = arith.constant 0 : index
    %c0_17 = arith.constant 0 : index
    %14 = vector.load %arg9[%c0_15, %c9, %c0_16, %c0_17] : memref<1x10x16x8xbf16, #tpu.memory_space<vmem>>, vector<1x1x10x8xbf16>
    tpu.vector_store %arg9[%c0_15, %c9, %c0_16, %c0_17], %12 {strides = array<i32>} : memref<1x10x16x8xbf16, #tpu.memory_space<vmem>>, vector<1x1x10x8xbf16>,
    %cst_18 = arith.constant 0.000000e+00 : bf16
    %15 = vector.broadcast %cst_18 : bf16 to vector<1x8x1x8xbf16>
    %c0_19 = arith.constant 0 : index
    %c1_20 = arith.constant 1 : index
    %c0_21 = arith.constant 0 : index
    %c0_22 = arith.constant 0 : index
    %16 = vector.load %arg9[%c0_19, %c1_20, %c0_21, %c0_22] : memref<1x10x16x8xbf16, #tpu.memory_space<vmem>>, vector<1x8x1x8xbf16>
    tpu.vector_store %arg9[%c0_19, %c1_20, %c0_21, %c0_22], %15 {strides = array<i32>} : memref<1x10x16x8xbf16, #tpu.memory_space<vmem>>, vector<1x8x1x8xbf16>,
    %c0_23 = arith.constant 0 : index
    %c1_24 = arith.constant 1 : index
    %c9_25 = arith.constant 9 : index
    %c0_26 = arith.constant 0 : index
    %17 = vector.load %arg9[%c0_23, %c1_24, %c9_25, %c0_26] : memref<1x10x16x8xbf16, #tpu.memory_space<vmem>>, vector<1x8x1x8xbf16>
    tpu.vector_store %arg9[%c0_23, %c1_24, %c9_25, %c0_26], %15 {strides = array<i32>} : memref<1x10x16x8xbf16, #tpu.memory_space<vmem>>, vector<1x8x1x8xbf16>,
    %c0_27 = arith.constant 0 : index
    %c0_28 = arith.constant 0 : index
    %c0_29 = arith.constant 0 : index
    %c0_30 = arith.constant 0 : index
    %18 = vector.load %arg9[%c0_27, %c0_28, %c0_29, %c0_30] : memref<1x10x16x8xbf16, #tpu.memory_space<vmem>>, vector<1x8x8x8xbf16>
    %19 = vector.shape_cast %18 : vector<1x8x8x8xbf16> to vector<64x8xbf16>
    %c0_31 = arith.constant 0 : index
    %c0_32 = arith.constant 0 : index
    %c0_33 = arith.constant 0 : index
    %20 = vector.load %arg4[%c0_31, %c0_32, %c0_33] : memref<9x8x8xbf16, #tpu.memory_space<vmem>>, vector<1x8x8xbf16>
    %21 = vector.shape_cast %20 : vector<1x8x8xbf16> to vector<8x8xbf16>
    %cst_34 = arith.constant dense<0.000000e+00> : vector<64x8xf32>
    %22 = tpu.matmul %19, %21, %cst_34 {dimension_numbers = #tpu.dot_dimension_numbers<[1], [0], [0], [1], [0, 0, 1, 1], [], []>} : vector<64x8xbf16>, vector<8x8xbf16>, vector<64x8xf32> -> vector<64x8xf32>
    %c0_35 = arith.constant 0 : index
    %c0_36 = arith.constant 0 : index
    %c1_37 = arith.constant 1 : index
    %c0_38 = arith.constant 0 : index
    %23 = vector.load %arg9[%c0_35, %c0_36, %c1_37, %c0_38] : memref<1x10x16x8xbf16, #tpu.memory_space<vmem>>, vector<1x8x8x8xbf16>
    %24 = vector.shape_cast %23 : vector<1x8x8x8xbf16> to vector<64x8xbf16>
    %c1_39 = arith.constant 1 : index
    %c0_40 = arith.constant 0 : index
    %c0_41 = arith.constant 0 : index
    %25 = vector.load %arg4[%c1_39, %c0_40, %c0_41] : memref<9x8x8xbf16, #tpu.memory_space<vmem>>, vector<1x8x8xbf16>
    %26 = vector.shape_cast %25 : vector<1x8x8xbf16> to vector<8x8xbf16>
    %cst_42 = arith.constant dense<0.000000e+00> : vector<64x8xf32>
    %27 = tpu.matmul %24, %26, %cst_42 {dimension_numbers = #tpu.dot_dimension_numbers<[1], [0], [0], [1], [0, 0, 1, 1], [], []>} : vector<64x8xbf16>, vector<8x8xbf16>, vector<64x8xf32> -> vector<64x8xf32>
    %28 = arith.addf %22, %27 : vector<64x8xf32>
    %c0_43 = arith.constant 0 : index
    %c0_44 = arith.constant 0 : index
    %c2 = arith.constant 2 : index
    %c0_45 = arith.constant 0 : index
    %29 = vector.load %arg9[%c0_43, %c0_44, %c2, %c0_45] : memref<1x10x16x8xbf16, #tpu.memory_space<vmem>>, vector<1x8x8x8xbf16>
    %30 = vector.shape_cast %29 : vector<1x8x8x8xbf16> to vector<64x8xbf16>
    %c2_46 = arith.constant 2 : index
    %c0_47 = arith.constant 0 : index
    %c0_48 = arith.constant 0 : index
    %31 = vector.load %arg4[%c2_46, %c0_47, %c0_48] : memref<9x8x8xbf16, #tpu.memory_space<vmem>>, vector<1x8x8xbf16>
    %32 = vector.shape_cast %31 : vector<1x8x8xbf16> to vector<8x8xbf16>
    %cst_49 = arith.constant dense<0.000000e+00> : vector<64x8xf32>
    %33 = tpu.matmul %30, %32, %cst_49 {dimension_numbers = #tpu.dot_dimension_numbers<[1], [0], [0], [1], [0, 0, 1, 1], [], []>} : vector<64x8xbf16>, vector<8x8xbf16>, vector<64x8xf32> -> vector<64x8xf32>
    %34 = arith.addf %28, %33 : vector<64x8xf32>
    %c0_50 = arith.constant 0 : index
    %c1_51 = arith.constant 1 : index
    %c0_52 = arith.constant 0 : index
    %c0_53 = arith.constant 0 : index
    %35 = vector.load %arg9[%c0_50, %c1_51, %c0_52, %c0_53] : memref<1x10x16x8xbf16, #tpu.memory_space<vmem>>, vector<1x8x8x8xbf16>
    %36 = vector.shape_cast %35 : vector<1x8x8x8xbf16> to vector<64x8xbf16>
    %c3 = arith.constant 3 : index
    %c0_54 = arith.constant 0 : index
    %c0_55 = arith.constant 0 : index
    %37 = vector.load %arg4[%c3, %c0_54, %c0_55] : memref<9x8x8xbf16, #tpu.memory_space<vmem>>, vector<1x8x8xbf16>
    %38 = vector.shape_cast %37 : vector<1x8x8xbf16> to vector<8x8xbf16>
    %cst_56 = arith.constant dense<0.000000e+00> : vector<64x8xf32>
    %39 = tpu.matmul %36, %38, %cst_56 {dimension_numbers = #tpu.dot_dimension_numbers<[1], [0], [0], [1], [0, 0, 1, 1], [], []>} : vector<64x8xbf16>, vector<8x8xbf16>, vector<64x8xf32> -> vector<64x8xf32>
    %40 = arith.addf %34, %39 : vector<64x8xf32>
    %c0_57 = arith.constant 0 : index
    %c1_58 = arith.constant 1 : index
    %c1_59 = arith.constant 1 : index
    %c0_60 = arith.constant 0 : index
    %41 = vector.load %arg9[%c0_57, %c1_58, %c1_59, %c0_60] : memref<1x10x16x8xbf16, #tpu.memory_space<vmem>>, vector<1x8x8x8xbf16>
    %42 = vector.shape_cast %41 : vector<1x8x8x8xbf16> to vector<64x8xbf16>
    %c4 = arith.constant 4 : index
    %c0_61 = arith.constant 0 : index
    %c0_62 = arith.constant 0 : index
    %43 = vector.load %arg4[%c4, %c0_61, %c0_62] : memref<9x8x8xbf16, #tpu.memory_space<vmem>>, vector<1x8x8xbf16>
    %44 = vector.shape_cast %43 : vector<1x8x8xbf16> to vector<8x8xbf16>
    %cst_63 = arith.constant dense<0.000000e+00> : vector<64x8xf32>
    %45 = tpu.matmul %42, %44, %cst_63 {dimension_numbers = #tpu.dot_dimension_numbers<[1], [0], [0], [1], [0, 0, 1, 1], [], []>} : vector<64x8xbf16>, vector<8x8xbf16>, vector<64x8xf32> -> vector<64x8xf32>
    %46 = arith.addf %40, %45 : vector<64x8xf32>
    %c0_64 = arith.constant 0 : index
    %c1_65 = arith.constant 1 : index
    %c2_66 = arith.constant 2 : index
    %c0_67 = arith.constant 0 : index
    %47 = vector.load %arg9[%c0_64, %c1_65, %c2_66, %c0_67] : memref<1x10x16x8xbf16, #tpu.memory_space<vmem>>, vector<1x8x8x8xbf16>
    %48 = vector.shape_cast %47 : vector<1x8x8x8xbf16> to vector<64x8xbf16>
    %c5 = arith.constant 5 : index
    %c0_68 = arith.constant 0 : index
    %c0_69 = arith.constant 0 : index
    %49 = vector.load %arg4[%c5, %c0_68, %c0_69] : memref<9x8x8xbf16, #tpu.memory_space<vmem>>, vector<1x8x8xbf16>
    %50 = vector.shape_cast %49 : vector<1x8x8xbf16> to vector<8x8xbf16>
    %cst_70 = arith.constant dense<0.000000e+00> : vector<64x8xf32>
    %51 = tpu.matmul %48, %50, %cst_70 {dimension_numbers = #tpu.dot_dimension_numbers<[1], [0], [0], [1], [0, 0, 1, 1], [], []>} : vector<64x8xbf16>, vector<8x8xbf16>, vector<64x8xf32> -> vector<64x8xf32>
    %52 = arith.addf %46, %51 : vector<64x8xf32>
    %c0_71 = arith.constant 0 : index
    %c2_72 = arith.constant 2 : index
    %c0_73 = arith.constant 0 : index
    %c0_74 = arith.constant 0 : index
    %53 = vector.load %arg9[%c0_71, %c2_72, %c0_73, %c0_74] : memref<1x10x16x8xbf16, #tpu.memory_space<vmem>>, vector<1x8x8x8xbf16>
    %54 = vector.shape_cast %53 : vector<1x8x8x8xbf16> to vector<64x8xbf16>
    %c6 = arith.constant 6 : index
    %c0_75 = arith.constant 0 : index
    %c0_76 = arith.constant 0 : index
    %55 = vector.load %arg4[%c6, %c0_75, %c0_76] : memref<9x8x8xbf16, #tpu.memory_space<vmem>>, vector<1x8x8xbf16>
    %56 = vector.shape_cast %55 : vector<1x8x8xbf16> to vector<8x8xbf16>
    %cst_77 = arith.constant dense<0.000000e+00> : vector<64x8xf32>
    %57 = tpu.matmul %54, %56, %cst_77 {dimension_numbers = #tpu.dot_dimension_numbers<[1], [0], [0], [1], [0, 0, 1, 1], [], []>} : vector<64x8xbf16>, vector<8x8xbf16>, vector<64x8xf32> -> vector<64x8xf32>
    %58 = arith.addf %52, %57 : vector<64x8xf32>
    %c0_78 = arith.constant 0 : index
    %c2_79 = arith.constant 2 : index
    %c1_80 = arith.constant 1 : index
    %c0_81 = arith.constant 0 : index
    %59 = vector.load %arg9[%c0_78, %c2_79, %c1_80, %c0_81] : memref<1x10x16x8xbf16, #tpu.memory_space<vmem>>, vector<1x8x8x8xbf16>
    %60 = vector.shape_cast %59 : vector<1x8x8x8xbf16> to vector<64x8xbf16>
    %c7 = arith.constant 7 : index
    %c0_82 = arith.constant 0 : index
    %c0_83 = arith.constant 0 : index
    %61 = vector.load %arg4[%c7, %c0_82, %c0_83] : memref<9x8x8xbf16, #tpu.memory_space<vmem>>, vector<1x8x8xbf16>
    %62 = vector.shape_cast %61 : vector<1x8x8xbf16> to vector<8x8xbf16>
    %cst_84 = arith.constant dense<0.000000e+00> : vector<64x8xf32>
    %63 = tpu.matmul %60, %62, %cst_84 {dimension_numbers = #tpu.dot_dimension_numbers<[1], [0], [0], [1], [0, 0, 1, 1], [], []>} : vector<64x8xbf16>, vector<8x8xbf16>, vector<64x8xf32> -> vector<64x8xf32>
    %64 = arith.addf %58, %63 : vector<64x8xf32>
    %c0_85 = arith.constant 0 : index
    %c2_86 = arith.constant 2 : index
    %c2_87 = arith.constant 2 : index
    %c0_88 = arith.constant 0 : index
    %65 = vector.load %arg9[%c0_85, %c2_86, %c2_87, %c0_88] : memref<1x10x16x8xbf16, #tpu.memory_space<vmem>>, vector<1x8x8x8xbf16>
    %66 = vector.shape_cast %65 : vector<1x8x8x8xbf16> to vector<64x8xbf16>
    %c8 = arith.constant 8 : index
    %c0_89 = arith.constant 0 : index
    %c0_90 = arith.constant 0 : index
    %67 = vector.load %arg4[%c8, %c0_89, %c0_90] : memref<9x8x8xbf16, #tpu.memory_space<vmem>>, vector<1x8x8xbf16>
    %68 = vector.shape_cast %67 : vector<1x8x8xbf16> to vector<8x8xbf16>
    %cst_91 = arith.constant dense<0.000000e+00> : vector<64x8xf32>
    %69 = tpu.matmul %66, %68, %cst_91 {dimension_numbers = #tpu.dot_dimension_numbers<[1], [0], [0], [1], [0, 0, 1, 1], [], []>} : vector<64x8xbf16>, vector<8x8xbf16>, vector<64x8xf32> -> vector<64x8xf32>
    %70 = arith.addf %64, %69 : vector<64x8xf32>
    %c0_92 = arith.constant 0 : index
    %c0_93 = arith.constant 0 : index
    %71 = vector.load %arg5[%c0_92, %c0_93] : memref<1x8xf32, #tpu.memory_space<vmem>>, vector<1x8xf32>
    %72 = vector.broadcast %71 : vector<1x8xf32> to vector<64x8xf32>
    %73 = arith.addf %70, %72 : vector<64x8xf32>
    %cst_94 = arith.constant 0.000000e+00 : f32
    %74 = vector.broadcast %cst_94 : f32 to vector<64x8xf32>
    %75 = arith.maximumf %73, %74 : vector<64x8xf32>
    %76 = arith.truncf %75 : vector<64x8xf32> to vector<64x8xbf16>
    %c0_95 = arith.constant 0 : index
    %c0_96 = arith.constant 0 : index
    %77 = vector.load %arg6[%c0_95, %c0_96] : memref<8x32xbf16, #tpu.memory_space<vmem>>, vector<8x32xbf16>
    %cst_97 = arith.constant dense<0.000000e+00> : vector<64x32xf32>
    %78 = tpu.matmul %76, %77, %cst_97 {dimension_numbers = #tpu.dot_dimension_numbers<[1], [0], [0], [1], [0, 0, 1, 1], [], []>} : vector<64x8xbf16>, vector<8x32xbf16>, vector<64x32xf32> -> vector<64x32xf32>
    %c0_98 = arith.constant 0 : index
    %c0_99 = arith.constant 0 : index
    %79 = vector.load %arg7[%c0_98, %c0_99] : memref<1x32xf32, #tpu.memory_space<vmem>>, vector<1x32xf32>
    %80 = vector.broadcast %79 : vector<1x32xf32> to vector<64x32xf32>
    %81 = arith.addf %78, %80 : vector<64x32xf32>
    %82 = arith.extf %1 : vector<64x32xbf16> to vector<64x32xf32>
    %83 = arith.addf %81, %82 : vector<64x32xf32>
    %cst_100 = arith.constant 0.000000e+00 : f32
    %84 = vector.broadcast %cst_100 : f32 to vector<64x32xf32>
    %85 = arith.maximumf %83, %84 : vector<64x32xf32>
    %86 = vector.shape_cast %85 : vector<64x32xf32> to vector<1x64x32xf32>
    %87 = arith.truncf %86 : vector<1x64x32xf32> to vector<1x64x32xbf16>
    %c0_101 = arith.constant 0 : index
    %c0_102 = arith.constant 0 : index
    %c0_103 = arith.constant 0 : index
    %88 = vector.load %arg8[%c0_101, %c0_102, %c0_103] : memref<1x64x32xbf16, #tpu.memory_space<vmem>>, vector<1x64x32xbf16>
    tpu.vector_store %arg8[%c0_101, %c0_102, %c0_103], %87 {strides = array<i32>} : memref<1x64x32xbf16, #tpu.memory_space<vmem>>, vector<1x64x32xbf16>,
    return
  }
  func.func @transform_0(%arg0: i32) -> (i32, i32, i32) {
    %c0_i32 = arith.constant 0 : i32
    %c0_i32_0 = arith.constant 0 : i32
    %c0_i32_1 = arith.constant 0 : i32
    return %arg0, %c0_i32, %c0_i32_0 : i32, i32, i32
  }
  func.func @transform_1(%arg0: i32) -> (i32, i32) {
    %c0_i32 = arith.constant 0 : i32
    %c0_i32_0 = arith.constant 0 : i32
    %c0_i32_1 = arith.constant 0 : i32
    return %c0_i32, %c0_i32_0 : i32, i32
  }
  func.func @transform_2(%arg0: i32) -> (i32, i32) {
    %c0_i32 = arith.constant 0 : i32
    %c0_i32_0 = arith.constant 0 : i32
    %c0_i32_1 = arith.constant 0 : i32
    return %c0_i32, %c0_i32_0 : i32, i32
  }
  func.func @transform_3(%arg0: i32) -> (i32, i32, i32) {
    %c0_i32 = arith.constant 0 : i32
    %c0_i32_0 = arith.constant 0 : i32
    %c0_i32_1 = arith.constant 0 : i32
    %c0_i32_2 = arith.constant 0 : i32
    return %c0_i32, %c0_i32_0, %c0_i32_1 : i32, i32, i32
  }
  func.func @transform_4(%arg0: i32) -> (i32, i32) {
    %c0_i32 = arith.constant 0 : i32
    %c0_i32_0 = arith.constant 0 : i32
    %c0_i32_1 = arith.constant 0 : i32
    return %c0_i32, %c0_i32_0 : i32, i32
  }
  func.func @transform_5(%arg0: i32) -> (i32, i32) {
    %c0_i32 = arith.constant 0 : i32
    %c0_i32_0 = arith.constant 0 : i32
    %c0_i32_1 = arith.constant 0 : i32
    return %c0_i32, %c0_i32_0 : i32, i32
  }
  func.func @transform_6(%arg0: i32) -> (i32, i32) {
    %c0_i32 = arith.constant 0 : i32
    %c0_i32_0 = arith.constant 0 : i32
    %c0_i32_1 = arith.constant 0 : i32
    return %c0_i32, %c0_i32_0 : i32, i32
  }
  func.func @transform_7(%arg0: i32) -> (i32, i32, i32) {
    %c0_i32 = arith.constant 0 : i32
    %c0_i32_0 = arith.constant 0 : i32
    %c0_i32_1 = arith.constant 0 : i32
    return %arg0, %c0_i32, %c0_i32_0 : i32, i32, i32
  }
}

</mosaic_0001>

<llo_original>
// kernel: tpu_custom_call.1
$region0: #{tpu_custom_call.1}
  #allocation0 [shape = 'u32[]', space=smem, size = 0x4, offset = 0x4, fixed_abs, tag = 'smem constant byte address 0x4 - core index']
  #allocation1 [shape = 'u32[144,128]{1,0:T(1,128)}', space=vmem, size = 0x12000, scoped, tag = 'internal scratch']
  #allocation2 [shape = 'bf16[1,10,16,8]{3,2,1,0:T(8,128)(2,1)}', space=vmem, size = 0xa000, scoped, tag = 'scratch operand']
  %s0 = inlined_call_operand.vmem [shape: bf16[2,64,32], index: 0, kind: input, shape index: {}]
  %s1 = inlined_call_operand.vmem [shape: bf16[32,8], index: 1, kind: input, shape index: {}]
  %s2 = inlined_call_operand.vmem [shape: f32[1,8], index: 2, kind: input, shape index: {}]
  %s3 = inlined_call_operand.vmem [shape: bf16[9,8,8], index: 3, kind: input, shape index: {}]
  %s4 = inlined_call_operand.vmem [shape: f32[1,8], index: 4, kind: input, shape index: {}]
  %s5 = inlined_call_operand.vmem [shape: bf16[8,32], index: 5, kind: input, shape index: {}]
  %s6 = inlined_call_operand.vmem [shape: f32[1,32], index: 6, kind: input, shape index: {}]
  %s7 = inlined_call_operand.vmem [shape: bf16[2,64,32], index: 7, kind: output, shape index: {}]
  %s8 = sld [smem:[#allocation0]]
  $region61: #{tpu_custom_call.1} parent=0
    _
  %s10 = ssub.s32 1, %s8
  %s11 = scalar_select 0, %s10, %s8
  loop: start=0, step=1, limit=4
  $region2: #{tpu_custom_call.1} parent=0 // loop_pre_header
    _
  $region3: #{tpu_custom_call.1} parent=0 // loop_header
    %s13 = sphi 0, %s17
    %p14 = scmp.ge.s32.totalorder %s13, 4
    %s23 = sphi 0, %s25
    %s26 = sphi 0, %s23
    %s27 = sphi 0, %s26
    %s43 = sphi 0, %s27
    %s47 = sphi 0, %s47
    %s49 = sphi 0, %s47
    %s50 = sphi 0, %s49
    %s64 = sphi 0, %s50
    %s68 = sphi 0, %s68
    %s70 = sphi 0, %s68
    %s71 = sphi 0, %s70
    %s85 = sphi 0, %s71
    %s89 = sphi 0, %s89
    %s91 = sphi 0, %s89
    %s92 = sphi 0, %s91
    %s106 = sphi 0, %s92
    %s110 = sphi 0, %s110
    %s112 = sphi 0, %s110
    %s113 = sphi 0, %s112
    %s127 = sphi 0, %s113
    %s131 = sphi 0, %s131
    %s133 = sphi 0, %s131
    %s134 = sphi 0, %s133
    %s148 = sphi 0, %s134
    %s152 = sphi 0, %s152
    %s154 = sphi 0, %s152
    %s155 = sphi 0, %s154
    %s169 = sphi 0, %s155
    %s175 = sphi 0, %s177
    %s178 = sphi 0, %s175
    %s179 = sphi 0, %s178
    %s195 = sphi 0, %s179
  $region4: #{tpu_custom_call.1} parent=0 // loop_header_branch
    %16 = sbr.rel (%p14) target = $region8
  $region5: #{tpu_custom_call.1} parent=0 // loop_body
    %s18 = ssub.s32 %s13, 1
    %s19 = ssub.s32 %s13, 2
    %s20 = sadd.s32 %s13, 1
    %s21 = ssub.s32 %s13, %s20
    %p22 = scmp.eq.s32.totalorder %s21, 0
    %s24 = sadd.s32 %s23, 1
    %s25 = scalar_select %p22, %s23, %s24
    %p28 = pneg %p22
    %p29 = scmp.eq.s32.totalorder %s13, 1
    %p30 = por %p28, %p29
    %p31 = scmp.ne.s32.totalorder %s23, %s26
    %p32 = scmp.eq.s32.totalorder %s13, 0
    %p33 = por %p31, %p32
    %p34 = scmp.ne.s32.totalorder %s23, %s26
    %p35 = scmp.eq.s32.totalorder %s18, 1
    %p36 = por %p34, %p35
    %p37 = scmp.ne.s32.totalorder %s26, %s27
    %p38 = scmp.eq.s32.totalorder %s18, 0
    %p39 = por %p37, %p38
    %p40 = scmp.ne.s32.totalorder %s26, %s27
    %p41 = scmp.eq.s32.totalorder %s19, 1
    %p42 = por %p40, %p41
    %p44 = scmp.ne.s32.totalorder %s27, %s43
    %p45 = scmp.eq.s32.totalorder %s19, 0
    %p46 = por %p44, %p45
    %s48 = sadd.s32 %s47, 1
    %p51 = scmp.eq.s32.totalorder %s13, 1
    %p52 = scmp.ne.s32.totalorder %s47, %s49
    %p53 = scmp.eq.s32.totalorder %s13, 0
    %p54 = por %p52, %p53
    %p55 = scmp.ne.s32.totalorder %s47, %s49
    %p56 = scmp.eq.s32.totalorder %s18, 1
    %p57 = por %p55, %p56
    %p58 = scmp.ne.s32.totalorder %s49, %s50
    %p59 = scmp.eq.s32.totalorder %s18, 0
    %p60 = por %p58, %p59
    %p61 = scmp.ne.s32.totalorder %s49, %s50
    %p62 = scmp.eq.s32.totalorder %s19, 1
    %p63 = por %p61, %p62
    %p65 = scmp.ne.s32.totalorder %s50, %s64
    %p66 = scmp.eq.s32.totalorder %s19, 0
    %p67 = por %p65, %p66
    %s69 = sadd.s32 %s68, 1
    %p72 = scmp.eq.s32.totalorder %s13, 1
    %p73 = scmp.ne.s32.totalorder %s68, %s70
    %p74 = scmp.eq.s32.totalorder %s13, 0
    %p75 = por %p73, %p74
    %p76 = scmp.ne.s32.totalorder %s68, %s70
    %p77 = scmp.eq.s32.totalorder %s18, 1
    %p78 = por %p76, %p77
    %p79 = scmp.ne.s32.totalorder %s70, %s71
    %p80 = scmp.eq.s32.totalorder %s18, 0
    %p81 = por %p79, %p80
    %p82 = scmp.ne.s32.totalorder %s70, %s71
    %p83 = scmp.eq.s32.totalorder %s19, 1
    %p84 = por %p82, %p83
    %p86 = scmp.ne.s32.totalorder %s71, %s85
    %p87 = scmp.eq.s32.totalorder %s19, 0
    %p88 = por %p86, %p87
    %s90 = sadd.s32 %s89, 1
    %p93 = scmp.eq.s32.totalorder %s13, 1
    %p94 = scmp.ne.s32.totalorder %s89, %s91
    %p95 = scmp.eq.s32.totalorder %s13, 0
    %p96 = por %p94, %p95
    %p97 = scmp.ne.s32.totalorder %s89, %s91
    %p98 = scmp.eq.s32.totalorder %s18, 1
    %p99 = por %p97, %p98
    %p100 = scmp.ne.s32.totalorder %s91, %s92
    %p101 = scmp.eq.s32.totalorder %s18, 0
    %p102 = por %p100, %p101
    %p103 = scmp.ne.s32.totalorder %s91, %s92
    %p104 = scmp.eq.s32.totalorder %s19, 1
    %p105 = por %p103, %p104
    %p107 = scmp.ne.s32.totalorder %s92, %s106
    %p108 = scmp.eq.s32.totalorder %s19, 0
    %p109 = por %p107, %p108
    %s111 = sadd.s32 %s110, 1
    %p114 = scmp.eq.s32.totalorder %s13, 1
    %p115 = scmp.ne.s32.totalorder %s110, %s112
    %p116 = scmp.eq.s32.totalorder %s13, 0
    %p117 = por %p115, %p116
    %p118 = scmp.ne.s32.totalorder %s110, %s112
    %p119 = scmp.eq.s32.totalorder %s18, 1
    %p120 = por %p118, %p119
    %p121 = scmp.ne.s32.totalorder %s112, %s113
    %p122 = scmp.eq.s32.totalorder %s18, 0
    %p123 = por %p121, %p122
    %p124 = scmp.ne.s32.totalorder %s112, %s113
    %p125 = scmp.eq.s32.totalorder %s19, 1
    %p126 = por %p124, %p125
    %p128 = scmp.ne.s32.totalorder %s113, %s127
    %p129 = scmp.eq.s32.totalorder %s19, 0
    %p130 = por %p128, %p129
    %s132 = sadd.s32 %s131, 1
    %p135 = scmp.eq.s32.totalorder %s13, 1
    %p136 = scmp.ne.s32.totalorder %s131, %s133
    %p137 = scmp.eq.s32.totalorder %s13, 0
    %p138 = por %p136, %p137
    %p139 = scmp.ne.s32.totalorder %s131, %s133
    %p140 = scmp.eq.s32.totalorder %s18, 1
    %p141 = por %p139, %p140
    %p142 = scmp.ne.s32.totalorder %s133, %s134
    %p143 = scmp.eq.s32.totalorder %s18, 0
    %p144 = por %p142, %p143
    %p145 = scmp.ne.s32.totalorder %s133, %s134
    %p146 = scmp.eq.s32.totalorder %s19, 1
    %p147 = por %p145, %p146
    %p149 = scmp.ne.s32.totalorder %s134, %s148
    %p150 = scmp.eq.s32.totalorder %s19, 0
    %p151 = por %p149, %p150
    %s153 = sadd.s32 %s152, 1
    %p156 = scmp.eq.s32.totalorder %s13, 1
    %p157 = scmp.ne.s32.totalorder %s152, %s154
    %p158 = scmp.eq.s32.totalorder %s13, 0
    %p159 = por %p157, %p158
    %p160 = scmp.ne.s32.totalorder %s152, %s154
    %p161 = scmp.eq.s32.totalorder %s18, 1
    %p162 = por %p160, %p161
    %p163 = scmp.ne.s32.totalorder %s154, %s155
    %p164 = scmp.eq.s32.totalorder %s18, 0
    %p165 = por %p163, %p164
    %p166 = scmp.ne.s32.totalorder %s154, %s155
    %p167 = scmp.eq.s32.totalorder %s19, 1
    %p168 = por %p166, %p167
    %p170 = scmp.ne.s32.totalorder %s155, %s169
    %p171 = scmp.eq.s32.totalorder %s19, 0
    %p172 = por %p170, %p171
    %s173 = ssub.s32 %s13, %s20
    %p174 = scmp.eq.s32.totalorder %s173, 0
    %s176 = sadd.s32 %s175, 1
    %s177 = scalar_select %p174, %s175, %s176
    %p180 = pneg %p174
    %p181 = scmp.eq.s32.totalorder %s13, 1
    %p182 = por %p180, %p181
    %p183 = scmp.ne.s32.totalorder %s175, %s178
    %p184 = scmp.eq.s32.totalorder %s13, 0
    %p185 = por %p183, %p184
    %p186 = scmp.ne.s32.totalorder %s175, %s178
    %p187 = scmp.eq.s32.totalorder %s18, 1
    %p188 = por %p186, %p187
    %p189 = scmp.ne.s32.totalorder %s178, %s179
    %p190 = scmp.eq.s32.totalorder %s18, 0
    %p191 = por %p189, %p190
    %p192 = scmp.ne.s32.totalorder %s178, %s179
    %p193 = scmp.eq.s32.totalorder %s19, 1
    %p194 = por %p192, %p193
    %p196 = scmp.ne.s32.totalorder %s179, %s195
    %p197 = scmp.eq.s32.totalorder %s19, 0
    %p198 = por %p196, %p197
    %p199 = scmp.le.s32.totalorder 1, %s13
    %p200 = scmp.lt.s32.totalorder %s13, 3
    %p201 = pnand %p199, %p200
    %p202 = pneg %p201
    // Predicated region
    $region9: #{tpu_custom_call.1} parent=5 // pred_check
      _
    $region10: #{tpu_custom_call.1} parent=5 // pred_check_branch
      %204 = sbr.rel (%p201) target = $region12
    $region11: #{tpu_custom_call.1} parent=5 // pred_region
      %s205 = ssub.s32 %s13, 1
      // Predicated region
      $region13: #{tpu_custom_call.1} parent=11 // pred_check
        %p206 = pneg %p60
      $region14: #{tpu_custom_call.1} parent=11 // pred_check_branch
        %208 = sbr.rel (%p206) target = $region16
      $region15: #{tpu_custom_call.1} parent=11 // pred_region
        _
      $region16: #{tpu_custom_call.1} parent=11 // pred_fallthru
        _
      // Predicated region
      $region17: #{tpu_custom_call.1} parent=11 // pred_check
        %p209 = pneg %p81
      $region18: #{tpu_custom_call.1} parent=11 // pred_check_branch
        %211 = sbr.rel (%p209) target = $region20
      $region19: #{tpu_custom_call.1} parent=11 // pred_region
        _
      $region20: #{tpu_custom_call.1} parent=11 // pred_fallthru
        _
      // Predicated region
      $region21: #{tpu_custom_call.1} parent=11 // pred_check
        %p212 = pneg %p102
      $region22: #{tpu_custom_call.1} parent=11 // pred_check_branch
        %214 = sbr.rel (%p212) target = $region24
      $region23: #{tpu_custom_call.1} parent=11 // pred_region
        _
      $region24: #{tpu_custom_call.1} parent=11 // pred_fallthru
        _
      // Predicated region
      $region25: #{tpu_custom_call.1} parent=11 // pred_check
        %p215 = pneg %p123
      $region26: #{tpu_custom_call.1} parent=11 // pred_check_branch
        %217 = sbr.rel (%p215) target = $region28
      $region27: #{tpu_custom_call.1} parent=11 // pred_region
        _
      $region28: #{tpu_custom_call.1} parent=11 // pred_fallthru
        _
      // Predicated region
      $region29: #{tpu_custom_call.1} parent=11 // pred_check
        %p218 = pneg %p144
      $region30: #{tpu_custom_call.1} parent=11 // pred_check_branch
        %220 = sbr.rel (%p218) target = $region32
      $region31: #{tpu_custom_call.1} parent=11 // pred_region
        _
      $region32: #{tpu_custom_call.1} parent=11 // pred_fallthru
        _
      // Predicated region
      $region33: #{tpu_custom_call.1} parent=11 // pred_check
        %p221 = pneg %p165
      $region34: #{tpu_custom_call.1} parent=11 // pred_check_branch
        %223 = sbr.rel (%p221) target = $region36
      $region35: #{tpu_custom_call.1} parent=11 // pred_region
        _
      $region36: #{tpu_custom_call.1} parent=11 // pred_fallthru
        _
    $region12: #{tpu_custom_call.1} parent=5 // pred_fallthru
      _
    %p224 = scmp.lt.s32.totalorder %s13, 2
    // Predicated region
    $region37: #{tpu_custom_call.1} parent=5 // pred_check
      %p225 = pneg %p224
    $region38: #{tpu_custom_call.1} parent=5 // pred_check_branch
      %227 = sbr.rel (%p225) target = $region40
    $region39: #{tpu_custom_call.1} parent=5 // pred_region
      // Predicated region
      $region41: #{tpu_custom_call.1} parent=39 // pred_check
        %p228 = pneg %p33
      $region42: #{tpu_custom_call.1} parent=39 // pred_check_branch
        %230 = sbr.rel (%p228) target = $region44
      $region43: #{tpu_custom_call.1} parent=39 // pred_region
        %p231 = scmp.lt.s32.totalorder %s13, 1
        %s232 = scalar_select %p231, %s13, 1
        %s233 = smul.addr %s232, 8
        %s234 = smul.addr %s233, 4
        %s235 = scalar_lea.vmem %s0, %s234
      $region44: #{tpu_custom_call.1} parent=39 // pred_fallthru
        _
    $region40: #{tpu_custom_call.1} parent=5 // pred_fallthru
      _
    %p236 = scmp.le.s32.totalorder 1, %s13
    %p237 = scmp.lt.s32.totalorder %s13, 3
    %p238 = pnand %p236, %p237
    %p239 = pneg %p238
    // Predicated region
    $region45: #{tpu_custom_call.1} parent=5 // pred_check
      _
    $region46: #{tpu_custom_call.1} parent=5 // pred_check_branch
      %241 = sbr.rel (%p238) target = $region48
    $region47: #{tpu_custom_call.1} parent=5 // pred_region
      %s242 = ssub.s32 %s13, 1
      %p243 = scmp.lt.s32.totalorder %s18, 1
      %s244 = scalar_select %p243, %s18, 1
      %s245 = smul.addr %s244, 8
      %s246 = smul.addr %s245, 4
      %s247 = scalar_lea.vmem %s0, %s246
      %p248 = pneg %p39
      %p249 = pneg %p36
      %p250 = pneg %p60
      %p251 = pneg %p57
      %p252 = pneg %p81
      %p253 = pneg %p78
      %p254 = pneg %p102
      %p255 = pneg %p99
      %p256 = pneg %p123
      %p257 = pneg %p120
      %p258 = pneg %p144
      %p259 = pneg %p141
      %p260 = pneg %p165
      %p261 = pneg %p162
      %p262 = pneg %p191
      %p263 = pneg %p188
      %p264 = scmp.lt.s32.totalorder %s18, 1
      %s265 = scalar_select %p264, %s18, 1
      %s266 = smul.addr %s265, 8
      %s267 = smul.addr %s266, 4
      %s268 = scalar_lea.vmem %s7, %s267
      %p269 = scmp.lt.s32.totalorder %s18, 1
      %s270 = scalar_select %p269, %s18, 1
      %s271 = smul.addr %s270, 8
      %s272 = smul.addr %s271, 4
      %s273 = scalar_lea.vmem %s0, %s272
      %p274 = scmp.lt.s32.totalorder %s18, 1
      %s275 = scalar_select %p274, %s18, 1
      %s276 = smul.addr %s275, 8
      %s277 = smul.addr %s276, 4
      %s278 = scalar_lea.vmem %s7, %s277
      %v280 = vld [vmem:[%s273] sm:$0xf]
      %v281 = vld [vmem:[%s273 + $0x4] sm:$0xf]
      %v282 = vld [vmem:[%s273 + $0x8] sm:$0xf]
      %v283 = vld [vmem:[%s273 + $0xc] sm:$0xf]
      %v284 = vld [vmem:[%s273 + $0x10] sm:$0xf]
      %v285 = vld [vmem:[%s273 + $0x14] sm:$0xf]
      %v286 = vld [vmem:[%s273 + $0x18] sm:$0xf]
      %v287 = vld [vmem:[%s273 + $0x1c] sm:$0xf]
      %v288 = vld [vmem:[%s1] sm:$0xf]
      %v289 = vld [vmem:[%s1 + $0x4] sm:$0xf]
      %v290 = vld [vmem:[%s1 + $0x8] sm:$0xf]
      %v291 = vld [vmem:[%s1 + $0xc] sm:$0xf]
      %v292 = vld [vmem:[%s2] sm:$0x1]
      %v294 = vlaneseq
      %v295 = vshrl.u32 %v294, 7
      %v296 = vsub.s32 0, %v295
      %v297 = vrot.slane %v292, %v296
      %v307 = vunpack.c.l.b16 %v280
      %v308 = vunpack.c.l.b16 %v281
      %v309 = vunpack.c.l.b16 %v282
      %v310 = vunpack.c.l.b16 %v283
      %v311 = vunpack.c.l.b16 %v284
      %v312 = vunpack.c.l.b16 %v285
      %v313 = vunpack.c.l.b16 %v286
      %v314 = vunpack.c.l.b16 %v287
      %v315 = vpack.c.b16 %v308, %v307
      %v316 = vpack.c.b16 %v310, %v309
      %v317 = vpack.c.b16 %v312, %v311
      %v318 = vpack.c.b16 %v314, %v313
      %v323 = vunpack.c.l.b16 %v288
      %v324 = vunpack.c.l.b16 %v289
      %v325 = vunpack.c.l.b16 %v290
      %v326 = vunpack.c.l.b16 %v291
      %v327 = vpack.c.b16 %v324, %v323
      %v328 = vpack.c.b16 %v326, %v325
      %vm331 = vcmask 261120
      %v333 = vsel %vm331, %v315, 0
      %v336 = vsel %vm331, %v316, 0
      %v339 = vsel %vm331, %v317, 0
      %v342 = vsel %vm331, %v318, 0
      %344 = vmatprep.subr.bf16.mxu0 0
      %345 = vmatpush1.bf16.msra.mxu0 0
      %346 = vmatprep.subr.bf16.mxu0 0
      %347 = vmatpush1.bf16.msra.mxu0 0
      %348 = vmatprep.subr.bf16.mxu0 0
      %349 = vmatpush1.bf16.msra.mxu0 0
      %350 = vmatprep.subr.bf16.mxu0 0
      %351 = vmatpush1.bf16.msra.mxu0 0
      %352 = vmatprep.subr.bf16.mxu0 0
      %353 = vmatpush1.bf16.msra.mxu0 0
      %354 = vmatprep.subr.bf16.mxu0 0
      %355 = vmatpush1.bf16.msra.mxu0 0
      %356 = vmatprep.subr.bf16.mxu0 0
      %357 = vmatpush1.bf16.msra.mxu0 %v328
      %358 = vmatprep.subr.bf16.mxu0 0
      %359 = vmatpush1.bf16.msra.mxu0 %v327
      %360 = vmatprep.subr.bf16.mxu0 0
      %361 = vmatpush2.bf16.msra.mxu0 0
      %362 = vmatprep.subr.bf16.mxu0 0
      %363 = vmatpush2.bf16.msra.mxu0 0
      %364 = vmatprep.subr.bf16.mxu0 0
      %365 = vmatpush2.bf16.msra.mxu0 0
      %366 = vmatprep.subr.bf16.mxu0 0
      %367 = vmatpush2.bf16.msra.mxu0 0
      %368 = vmatprep.subr.bf16.mxu0 0
      %369 = vmatpush2.bf16.msra.mxu0 0
      %370 = vmatprep.subr.bf16.mxu0 0
      %371 = vmatpush2.bf16.msra.mxu0 0
      %372 = vmatprep.subr.bf16.mxu0 0
      %373 = vmatpush2.bf16.msra.mxu0 0
      %374 = vmatprep.subr.bf16.mxu0 0
      %375 = vmatpush2.bf16.msra.mxu0 0
      %376 = vmatprep.mubr.bf16.mxu0 0
      %377 = vmatmul.mubr.bf16.gmra.mxu0 %v333
      %v378 = vpop.f32.mrf.mxu0
      %v379 = vadd.f32 %v297, %v378
      %v380 = vpop.f32.mrf.mxu0
      %v381 = vpop.f32.mrf.mxu0
      %v382 = vadd.f32 %v297, %v381
      %v383 = vpop.f32.mrf.mxu0
      %384 = vmatprep.mubr.bf16.mxu0 0
      %385 = vmatmul.mubr.bf16.gmra.mxu0 %v336
      %v386 = vpop.f32.mrf.mxu0
      %v387 = vadd.f32 %v297, %v386
      %v388 = vpop.f32.mrf.mxu0
      %v389 = vpop.f32.mrf.mxu0
      %v390 = vadd.f32 %v297, %v389
      %v391 = vpop.f32.mrf.mxu0
      %392 = vmatprep.mubr.bf16.mxu0 0
      %393 = vmatmul.mubr.bf16.gmra.mxu0 %v339
      %v394 = vpop.f32.mrf.mxu0
      %v395 = vadd.f32 %v297, %v394
      %v396 = vpop.f32.mrf.mxu0
      %v397 = vpop.f32.mrf.mxu0
      %v398 = vadd.f32 %v297, %v397
      %v399 = vpop.f32.mrf.mxu0
      %400 = vmatprep.mubr.bf16.mxu0 0
      %401 = vmatmul.mubr.bf16.gmra.mxu0 %v342
      %v402 = vpop.f32.mrf.mxu0
      %v403 = vadd.f32 %v297, %v402
      %v404 = vpop.f32.mrf.mxu0
      %v405 = vpop.f32.mrf.mxu0
      %v406 = vadd.f32 %v297, %v405
      %v407 = vpop.f32.mrf.mxu0
      %408 = vdwg.mxu0
      %v409 = vmax.f32 %v379, 0.0
      %v410 = vmax.f32 %v382, 0.0
      %v411 = vmax.f32 %v387, 0.0
      %v412 = vmax.f32 %v390, 0.0
      %v413 = vmax.f32 %v395, 0.0
      %v414 = vmax.f32 %v398, 0.0
      %v415 = vmax.f32 %v403, 0.0
      %v416 = vmax.f32 %v406, 0.0
      %v417 = vpack.c.bf16 %v409, %v409
      %v418 = vpack.c.bf16 %v410, %v410
      %v419 = vpack.c.bf16 %v411, %v411
      %v420 = vpack.c.bf16 %v412, %v412
      %v421 = vpack.c.bf16 %v413, %v413
      %v422 = vpack.c.bf16 %v414, %v414
      %v423 = vpack.c.bf16 %v415, %v415
      %v424 = vpack.c.bf16 %v416, %v416
      %v433 = vunpack.c.l.b16 %v417
      %v434 = vunpack.c.l.b16 %v418
      %v435 = vunpack.c.l.b16 %v419
      %v436 = vunpack.c.l.b16 %v420
      %v437 = vunpack.c.l.b16 %v421
      %v438 = vunpack.c.l.b16 %v422
      %v439 = vunpack.c.l.b16 %v423
      %v440 = vunpack.c.l.b16 %v424
      %v441 = vpack.c.b16 %v433, %v433
      %v442 = vpack.c.b16 %v434, %v434
      %v443 = vpack.c.b16 %v435, %v435
      %v444 = vpack.c.b16 %v436, %v436
      %v445 = vpack.c.b16 %v437, %v437
      %v446 = vpack.c.b16 %v438, %v438
      %v447 = vpack.c.b16 %v439, %v439
      %v448 = vpack.c.b16 %v440, %v440
      %v450 = vshrl.u32 %v441, 16
      %v452 = vrot.slane %v450, 7
      %v453 = vshll.u32 %v441, 16
      %v455 = vor.u32 %v452, %v453
      %v456 = vrot.slane %v452, 4
      %v458 = vshrl.u32 %v442, 16
      %v460 = vrot.slane %v458, 7
      %v461 = vshll.u32 %v442, 16
      %v463 = vor.u32 %v460, %v461
      %v464 = vrot.slane %v460, 4
      %v466 = vshrl.u32 %v443, 16
      %v468 = vrot.slane %v466, 7
      %v469 = vshll.u32 %v443, 16
      %v471 = vor.u32 %v468, %v469
      %v472 = vrot.slane %v468, 4
      %v474 = vshrl.u32 %v444, 16
      %v476 = vrot.slane %v474, 7
      %v477 = vshll.u32 %v444, 16
      %v479 = vor.u32 %v476, %v477
      %v480 = vrot.slane %v476, 4
      %v482 = vshrl.u32 %v445, 16
      %v484 = vrot.slane %v482, 7
      %v485 = vshll.u32 %v445, 16
      %v487 = vor.u32 %v484, %v485
      %v488 = vrot.slane %v484, 4
      %v490 = vshrl.u32 %v446, 16
      %v492 = vrot.slane %v490, 7
      %v493 = vshll.u32 %v446, 16
      %v495 = vor.u32 %v492, %v493
      %v496 = vrot.slane %v492, 4
      %v498 = vshrl.u32 %v447, 16
      %v500 = vrot.slane %v498, 7
      %v501 = vshll.u32 %v447, 16
      %v503 = vor.u32 %v500, %v501
      %v504 = vrot.slane %v500, 4
      %v506 = vshrl.u32 %v448, 16
      %v508 = vrot.slane %v506, 7
      %v509 = vshll.u32 %v448, 16
      %v511 = vor.u32 %v508, %v509
      %v512 = vrot.slane %v508, 4
      %s529 = scalar_lea.vmem [#allocation2], 8
      %vm530 = vcmask 60416
      %vm531 = vsmask.f32 7938
      %vm532 = vmand %vm530, %vm531
      %v533 = vld [vmem:[%s529] sm:$0xf]
      %v534 = vsel %vm532, %v455, %v533
      %535 = vst [vmem:[%s529] sm:$0xf] %v534
      %vm536 = vcmask 57344
      %vm537 = vsmask.f32 256
      %vm538 = vmand %vm536, %vm537
      %v539 = vld [vmem:[%s529 + $0x4] sm:$0x1]
      %v540 = vsel %vm538, %v456, %v539
      %541 = vst [vmem:[%s529 + $0x4] sm:$0x1] %v540
      %v542 = vld [vmem:[%s529 + $0x8] sm:$0xf]
      %v543 = vsel %vm532, %v463, %v542
      %544 = vst [vmem:[%s529 + $0x8] sm:$0xf] %v543
      %v545 = vld [vmem:[%s529 + $0xc] sm:$0x1]
      %v546 = vsel %vm538, %v464, %v545
      %547 = vst [vmem:[%s529 + $0xc] sm:$0x1] %v546
      %v548 = vld [vmem:[%s529 + $0x10] sm:$0xf]
      %v549 = vsel %vm532, %v471, %v548
      %550 = vst [vmem:[%s529 + $0x10] sm:$0xf] %v549
      %v551 = vld [vmem:[%s529 + $0x14] sm:$0x1]
      %v552 = vsel %vm538, %v472, %v551
      %553 = vst [vmem:[%s529 + $0x14] sm:$0x1] %v552
      %v554 = vld [vmem:[%s529 + $0x18] sm:$0xf]
      %v555 = vsel %vm532, %v479, %v554
      %556 = vst [vmem:[%s529 + $0x18] sm:$0xf] %v555
      %v557 = vld [vmem:[%s529 + $0x1c] sm:$0x1]
      %v558 = vsel %vm538, %v480, %v557
      %559 = vst [vmem:[%s529 + $0x1c] sm:$0x1] %v558
      %v560 = vld [vmem:[%s529 + $0x20] sm:$0xf]
      %v561 = vsel %vm532, %v487, %v560
      %562 = vst [vmem:[%s529 + $0x20] sm:$0xf] %v561
      %v563 = vld [vmem:[%s529 + $0x24] sm:$0x1]
      %v564 = vsel %vm538, %v488, %v563
      %565 = vst [vmem:[%s529 + $0x24] sm:$0x1] %v564
      %v566 = vld [vmem:[%s529 + $0x28] sm:$0xf]
      %v567 = vsel %vm532, %v495, %v566
      %568 = vst [vmem:[%s529 + $0x28] sm:$0xf] %v567
      %v569 = vld [vmem:[%s529 + $0x2c] sm:$0x1]
      %v570 = vsel %vm538, %v496, %v569
      %571 = vst [vmem:[%s529 + $0x2c] sm:$0x1] %v570
      %v572 = vld [vmem:[%s529 + $0x30] sm:$0xf]
      %v573 = vsel %vm532, %v503, %v572
      %574 = vst [vmem:[%s529 + $0x30] sm:$0xf] %v573
      %v575 = vld [vmem:[%s529 + $0x34] sm:$0x1]
      %v576 = vsel %vm538, %v504, %v575
      %577 = vst [vmem:[%s529 + $0x34] sm:$0x1] %v576
      %v578 = vld [vmem:[%s529 + $0x38] sm:$0xf]
      %v579 = vsel %vm532, %v511, %v578
      %580 = vst [vmem:[%s529 + $0x38] sm:$0xf] %v579
      %v581 = vld [vmem:[%s529 + $0x3c] sm:$0x1]
      %v582 = vsel %vm538, %v512, %v581
      %583 = vst [vmem:[%s529 + $0x3c] sm:$0x1] %v582
      %vm584 = vcmask 60416
      %585 = vst.msk [vmem:[#allocation2] sm:$0xf] %vm584, 0
      %vm586 = vcmask 57344
      %587 = vst.msk [vmem:[#allocation2 + $0x4] sm:$0x1] %vm586, 0
      %s588 = scalar_lea.vmem [#allocation2], 72
      %589 = vst.msk [vmem:[%s588] sm:$0xf] %vm584, 0
      %590 = vst.msk [vmem:[%s588 + $0x4] sm:$0x1] %vm586, 0
      %v591 = vld [vmem:[%s529] sm:$0x1]
      %v592 = vsel %vm538, 0, %v591
      %593 = vst [vmem:[%s529] sm:$0x1] %v592
      %v594 = vld [vmem:[%s529 + $0x8] sm:$0x1]
      %v595 = vsel %vm538, 0, %v594
      %596 = vst [vmem:[%s529 + $0x8] sm:$0x1] %v595
      %v597 = vld [vmem:[%s529 + $0x10] sm:$0x1]
      %v598 = vsel %vm538, 0, %v597
      %599 = vst [vmem:[%s529 + $0x10] sm:$0x1] %v598
      %v600 = vld [vmem:[%s529 + $0x18] sm:$0x1]
      %v601 = vsel %vm538, 0, %v600
      %602 = vst [vmem:[%s529 + $0x18] sm:$0x1] %v601
      %v603 = vld [vmem:[%s529 + $0x20] sm:$0x1]
      %v604 = vsel %vm538, 0, %v603
      %605 = vst [vmem:[%s529 + $0x20] sm:$0x1] %v604
      %v606 = vld [vmem:[%s529 + $0x28] sm:$0x1]
      %v607 = vsel %vm538, 0, %v606
      %608 = vst [vmem:[%s529 + $0x28] sm:$0x1] %v607
      %v609 = vld [vmem:[%s529 + $0x30] sm:$0x1]
      %v610 = vsel %vm538, 0, %v609
      %611 = vst [vmem:[%s529 + $0x30] sm:$0x1] %v610
      %v612 = vld [vmem:[%s529 + $0x38] sm:$0x1]
      %v613 = vsel %vm538, 0, %v612
      %614 = vst [vmem:[%s529 + $0x38] sm:$0x1] %v613
      %vm615 = vmand %vm536, %vm531
      %v616 = vld [vmem:[%s529 + $0x4] sm:$0x1]
      %v617 = vsel %vm615, 0, %v616
      %618 = vst [vmem:[%s529 + $0x4] sm:$0x1] %v617
      %v619 = vld [vmem:[%s529 + $0xc] sm:$0x1]
      %v620 = vsel %vm615, 0, %v619
      %621 = vst [vmem:[%s529 + $0xc] sm:$0x1] %v620
      %v622 = vld [vmem:[%s529 + $0x14] sm:$0x1]
      %v623 = vsel %vm615, 0, %v622
      %624 = vst [vmem:[%s529 + $0x14] sm:$0x1] %v623
      %v625 = vld [vmem:[%s529 + $0x1c] sm:$0x1]
      %v626 = vsel %vm615, 0, %v625
      %627 = vst [vmem:[%s529 + $0x1c] sm:$0x1] %v626
      %v628 = vld [vmem:[%s529 + $0x24] sm:$0x1]
      %v629 = vsel %vm615, 0, %v628
      %630 = vst [vmem:[%s529 + $0x24] sm:$0x1] %v629
      %v631 = vld [vmem:[%s529 + $0x2c] sm:$0x1]
      %v632 = vsel %vm615, 0, %v631
      %633 = vst [vmem:[%s529 + $0x2c] sm:$0x1] %v632
      %v634 = vld [vmem:[%s529 + $0x34] sm:$0x1]
      %v635 = vsel %vm615, 0, %v634
      %636 = vst [vmem:[%s529 + $0x34] sm:$0x1] %v635
      %v637 = vld [vmem:[%s529 + $0x3c] sm:$0x1]
      %v638 = vsel %vm615, 0, %v637
      %639 = vst [vmem:[%s529 + $0x3c] sm:$0x1] %v638
      %v640 = vld [vmem:[#allocation2] sm:$0xf]
      %v641 = vld [vmem:[#allocation2 + $0x8] sm:$0xf]
      %v642 = vld [vmem:[#allocation2 + $0x10] sm:$0xf]
      %v643 = vld [vmem:[#allocation2 + $0x18] sm:$0xf]
      %v644 = vld [vmem:[#allocation2 + $0x20] sm:$0xf]
      %v645 = vld [vmem:[#allocation2 + $0x28] sm:$0xf]
      %v646 = vld [vmem:[#allocation2 + $0x30] sm:$0xf]
      %v647 = vld [vmem:[#allocation2 + $0x38] sm:$0xf]
      %v648 = vld [vmem:[%s3] sm:$0xf]
      %v649 = vld [vmem:[#allocation2 + $0x4] sm:$0x1]
      %v650 = vld [vmem:[#allocation2 + $0xc] sm:$0x1]
      %v651 = vld [vmem:[#allocation2 + $0x14] sm:$0x1]
      %v652 = vld [vmem:[#allocation2 + $0x1c] sm:$0x1]
      %v653 = vld [vmem:[#allocation2 + $0x24] sm:$0x1]
      %v654 = vld [vmem:[#allocation2 + $0x2c] sm:$0x1]
      %v655 = vld [vmem:[#allocation2 + $0x34] sm:$0x1]
      %v656 = vld [vmem:[#allocation2 + $0x3c] sm:$0x1]
      %vm657 = vsmask.f32 3328
      %vm658 = vsmask.f32 7440
      %vm659 = vmor %vm657, %vm658
      %v661 = vshrl.u32 %v640, 16
      %v663 = vrot.slane %v661, 4
      %v664 = vshll.u32 %v640, 16
      %v666 = vrot.slane %v664, 5
      %v667 = vor.u32 %v663, %v666
      %v668 = vrot.slane %v667, 4
      %v670 = vshll.u32 %v649, 16
      %v672 = vrot.slane %v670, 5
      %v673 = vsel %vm659, %v668, %v672
      %v675 = vshrl.u32 %v641, 16
      %v677 = vrot.slane %v675, 4
      %v678 = vshll.u32 %v641, 16
      %v680 = vrot.slane %v678, 5
      %v681 = vor.u32 %v677, %v680
      %v682 = vrot.slane %v681, 4
      %v684 = vshll.u32 %v650, 16
      %v686 = vrot.slane %v684, 5
      %v687 = vsel %vm659, %v682, %v686
      %v689 = vshrl.u32 %v642, 16
      %v691 = vrot.slane %v689, 4
      %v692 = vshll.u32 %v642, 16
      %v694 = vrot.slane %v692, 5
      %v695 = vor.u32 %v691, %v694
      %v696 = vrot.slane %v695, 4
      %v698 = vshll.u32 %v651, 16
      %v700 = vrot.slane %v698, 5
      %v701 = vsel %vm659, %v696, %v700
      %v703 = vshrl.u32 %v643, 16
      %v705 = vrot.slane %v703, 4
      %v706 = vshll.u32 %v643, 16
      %v708 = vrot.slane %v706, 5
      %v709 = vor.u32 %v705, %v708
      %v710 = vrot.slane %v709, 4
      %v712 = vshll.u32 %v652, 16
      %v714 = vrot.slane %v712, 5
      %v715 = vsel %vm659, %v710, %v714
      %v717 = vshrl.u32 %v644, 16
      %v719 = vrot.slane %v717, 4
      %v720 = vshll.u32 %v644, 16
      %v722 = vrot.slane %v720, 5
      %v723 = vor.u32 %v719, %v722
      %v724 = vrot.slane %v723, 4
      %v726 = vshll.u32 %v653, 16
      %v728 = vrot.slane %v726, 5
      %v729 = vsel %vm659, %v724, %v728
      %v731 = vshrl.u32 %v645, 16
      %v733 = vrot.slane %v731, 4
      %v734 = vshll.u32 %v645, 16
      %v736 = vrot.slane %v734, 5
      %v737 = vor.u32 %v733, %v736
      %v738 = vrot.slane %v737, 4
      %v740 = vshll.u32 %v654, 16
      %v742 = vrot.slane %v740, 5
      %v743 = vsel %vm659, %v738, %v742
      %v745 = vshrl.u32 %v646, 16
      %v747 = vrot.slane %v745, 4
      %v748 = vshll.u32 %v646, 16
      %v750 = vrot.slane %v748, 5
      %v751 = vor.u32 %v747, %v750
      %v752 = vrot.slane %v751, 4
      %v754 = vshll.u32 %v655, 16
      %v756 = vrot.slane %v754, 5
      %v757 = vsel %vm659, %v752, %v756
      %v759 = vshrl.u32 %v647, 16
      %v761 = vrot.slane %v759, 4
      %v762 = vshll.u32 %v647, 16
      %v764 = vrot.slane %v762, 5
      %v765 = vor.u32 %v761, %v764
      %v766 = vrot.slane %v765, 4
      %v768 = vshll.u32 %v656, 16
      %v770 = vrot.slane %v768, 5
      %v771 = vsel %vm659, %v766, %v770
      %s772 = scalar_lea.vmem %s3, 4
      %v773 = vld [vmem:[%s772] sm:$0xf]
      %v774 = vunpack.c.l.b16 %v673
      %v775 = vunpack.c.l.b16 %v687
      %v776 = vunpack.c.l.b16 %v701
      %v777 = vunpack.c.l.b16 %v715
      %v778 = vunpack.c.l.b16 %v729
      %v779 = vunpack.c.l.b16 %v743
      %v780 = vunpack.c.l.b16 %v757
      %v781 = vunpack.c.l.b16 %v771
      %v782 = vpack.c.b16 %v775, %v774
      %v783 = vpack.c.b16 %v777, %v776
      %v784 = vpack.c.b16 %v779, %v778
      %v785 = vpack.c.b16 %v781, %v780
      %vm786 = vcmask 64512
      %v788 = vsel %vm786, %v782, 0
      %v791 = vsel %vm786, %v783, 0
      %v794 = vsel %vm786, %v784, 0
      %v797 = vsel %vm786, %v785, 0
      %vm799 = vcmask 1043456
      %v801 = vsel %vm799, %v773, 0
      %803 = vmatprep.subr.bf16.mxu0 0
      %804 = vmatpush1.bf16.msra.mxu0 0
      %805 = vmatprep.subr.bf16.mxu0 0
      %806 = vmatpush1.bf16.msra.mxu0 0
      %807 = vmatprep.subr.bf16.mxu0 0
      %808 = vmatpush1.bf16.msra.mxu0 0
      %809 = vmatprep.subr.bf16.mxu0 0
      %810 = vmatpush1.bf16.msra.mxu0 0
      %811 = vmatprep.subr.bf16.mxu0 0
      %812 = vmatpush1.bf16.msra.mxu0 0
      %813 = vmatprep.subr.bf16.mxu0 0
      %814 = vmatpush1.bf16.msra.mxu0 0
      %815 = vmatprep.subr.bf16.mxu0 0
      %816 = vmatpush1.bf16.msra.mxu0 0
      %817 = vmatprep.subr.bf16.mxu0 0
      %818 = vmatpush1.bf16.msra.mxu0 %v801
      %819 = vmatprep.subr.bf16.mxu0 0
      %820 = vmatpush2.bf16.msra.mxu0 0
      %821 = vmatprep.subr.bf16.mxu0 0
      %822 = vmatpush2.bf16.msra.mxu0 0
      %823 = vmatprep.subr.bf16.mxu0 0
      %824 = vmatpush2.bf16.msra.mxu0 0
      %825 = vmatprep.subr.bf16.mxu0 0
      %826 = vmatpush2.bf16.msra.mxu0 0
      %827 = vmatprep.subr.bf16.mxu0 0
      %828 = vmatpush2.bf16.msra.mxu0 0
      %829 = vmatprep.subr.bf16.mxu0 0
      %830 = vmatpush2.bf16.msra.mxu0 0
      %831 = vmatprep.subr.bf16.mxu0 0
      %832 = vmatpush2.bf16.msra.mxu0 0
      %833 = vmatprep.subr.bf16.mxu0 0
      %834 = vmatpush2.bf16.msra.mxu0 0
      %835 = vmatprep.mubr.bf16.mxu0 0
      %836 = vmatmul.mubr.bf16.gmra.mxu0 %v788
      %v837 = vpop.f32.mrf.mxu0
      %v838 = vadd.f32 0.0, %v837
      %v839 = vpop.f32.mrf.mxu0
      %v840 = vpop.f32.mrf.mxu0
      %v841 = vadd.f32 0.0, %v840
      %v842 = vpop.f32.mrf.mxu0
      %843 = vmatprep.mubr.bf16.mxu0 0
      %844 = vmatmul.mubr.bf16.gmra.mxu0 %v791
      %v845 = vpop.f32.mrf.mxu0
      %v846 = vadd.f32 0.0, %v845
      %v847 = vpop.f32.mrf.mxu0
      %v848 = vpop.f32.mrf.mxu0
      %v849 = vadd.f32 0.0, %v848
      %v850 = vpop.f32.mrf.mxu0
      %851 = vmatprep.mubr.bf16.mxu0 0
      %852 = vmatmul.mubr.bf16.gmra.mxu0 %v794
      %v853 = vpop.f32.mrf.mxu0
      %v854 = vadd.f32 0.0, %v853
      %v855 = vpop.f32.mrf.mxu0
      %v856 = vpop.f32.mrf.mxu0
      %v857 = vadd.f32 0.0, %v856
      %v858 = vpop.f32.mrf.mxu0
      %859 = vmatprep.mubr.bf16.mxu0 0
      %860 = vmatmul.mubr.bf16.gmra.mxu0 %v797
      %v861 = vpop.f32.mrf.mxu0
      %v862 = vadd.f32 0.0, %v861
      %v863 = vpop.f32.mrf.mxu0
      %v864 = vpop.f32.mrf.mxu0
      %v865 = vadd.f32 0.0, %v864
      %v866 = vpop.f32.mrf.mxu0
      %867 = vdwg.mxu0
      %v876 = vunpack.c.l.b16 %v640
      %v877 = vunpack.c.l.b16 %v641
      %v878 = vunpack.c.l.b16 %v642
      %v879 = vunpack.c.l.b16 %v643
      %v880 = vunpack.c.l.b16 %v644
      %v881 = vunpack.c.l.b16 %v645
      %v882 = vunpack.c.l.b16 %v646
      %v883 = vunpack.c.l.b16 %v647
      %v884 = vpack.c.b16 %v877, %v876
      %v885 = vpack.c.b16 %v879, %v878
      %v886 = vpack.c.b16 %v881, %v880
      %v887 = vpack.c.b16 %v883, %v882
      %v889 = vsel %vm786, %v884, 0
      %v892 = vsel %vm786, %v885, 0
      %v895 = vsel %vm786, %v886, 0
      %v898 = vsel %vm786, %v887, 0
      %v901 = vsel %vm799, %v648, 0
      %903 = vmatprep.subr.bf16.mxu0 0
      %904 = vmatpush1.bf16.msra.mxu0 0
      %905 = vmatprep.subr.bf16.mxu0 0
      %906 = vmatpush1.bf16.msra.mxu0 0
      %907 = vmatprep.subr.bf16.mxu0 0
      %908 = vmatpush1.bf16.msra.mxu0 0
      %909 = vmatprep.subr.bf16.mxu0 0
      %910 = vmatpush1.bf16.msra.mxu0 0
      %911 = vmatprep.subr.bf16.mxu0 0
      %912 = vmatpush1.bf16.msra.mxu0 0
      %913 = vmatprep.subr.bf16.mxu0 0
      %914 = vmatpush1.bf16.msra.mxu0 0
      %915 = vmatprep.subr.bf16.mxu0 0
      %916 = vmatpush1.bf16.msra.mxu0 0
      %917 = vmatprep.subr.bf16.mxu0 0
      %918 = vmatpush1.bf16.msra.mxu0 %v901
      %919 = vmatprep.subr.bf16.mxu0 0
      %920 = vmatpush2.bf16.msra.mxu0 0
      %921 = vmatprep.subr.bf16.mxu0 0
      %922 = vmatpush2.bf16.msra.mxu0 0
      %923 = vmatprep.subr.bf16.mxu0 0
      %924 = vmatpush2.bf16.msra.mxu0 0
      %925 = vmatprep.subr.bf16.mxu0 0
      %926 = vmatpush2.bf16.msra.mxu0 0
      %927 = vmatprep.subr.bf16.mxu0 0
      %928 = vmatpush2.bf16.msra.mxu0 0
      %929 = vmatprep.subr.bf16.mxu0 0
      %930 = vmatpush2.bf16.msra.mxu0 0
      %931 = vmatprep.subr.bf16.mxu0 0
      %932 = vmatpush2.bf16.msra.mxu0 0
      %933 = vmatprep.subr.bf16.mxu0 0
      %934 = vmatpush2.bf16.msra.mxu0 0
      %935 = vmatprep.mubr.bf16.mxu0 0
      %936 = vmatmul.mubr.bf16.gmra.mxu0 %v889
      %v937 = vpop.f32.mrf.mxu0
      %v938 = vadd.f32 %v838, %v937
      %v939 = vpop.f32.mrf.mxu0
      %v940 = vpop.f32.mrf.mxu0
      %v941 = vadd.f32 %v841, %v940
      %v942 = vpop.f32.mrf.mxu0
      %943 = vmatprep.mubr.bf16.mxu0 0
      %944 = vmatmul.mubr.bf16.gmra.mxu0 %v892
      %v945 = vpop.f32.mrf.mxu0
      %v946 = vadd.f32 %v846, %v945
      %v947 = vpop.f32.mrf.mxu0
      %v948 = vpop.f32.mrf.mxu0
      %v949 = vadd.f32 %v849, %v948
      %v950 = vpop.f32.mrf.mxu0
      %951 = vmatprep.mubr.bf16.mxu0 0
      %952 = vmatmul.mubr.bf16.gmra.mxu0 %v895
      %v953 = vpop.f32.mrf.mxu0
      %v954 = vadd.f32 %v854, %v953
      %v955 = vpop.f32.mrf.mxu0
      %v956 = vpop.f32.mrf.mxu0
      %v957 = vadd.f32 %v857, %v956
      %v958 = vpop.f32.mrf.mxu0
      %959 = vmatprep.mubr.bf16.mxu0 0
      %960 = vmatmul.mubr.bf16.gmra.mxu0 %v898
      %v961 = vpop.f32.mrf.mxu0
      %v962 = vadd.f32 %v862, %v961
      %v963 = vpop.f32.mrf.mxu0
      %v964 = vpop.f32.mrf.mxu0
      %v965 = vadd.f32 %v865, %v964
      %v966 = vpop.f32.mrf.mxu0
      %967 = vdwg.mxu0
      %v968 = vld [vmem:[#allocation2] sm:$0xe]
      %v969 = vld [vmem:[#allocation2 + $0x8] sm:$0xe]
      %v970 = vld [vmem:[#allocation2 + $0x10] sm:$0xe]
      %v971 = vld [vmem:[#allocation2 + $0x18] sm:$0xe]
      %v972 = vld [vmem:[#allocation2 + $0x20] sm:$0xe]
      %v973 = vld [vmem:[#allocation2 + $0x28] sm:$0xe]
      %v974 = vld [vmem:[#allocation2 + $0x30] sm:$0xe]
      %v975 = vld [vmem:[#allocation2 + $0x38] sm:$0xe]
      %vm992 = vcmask 1042432
      %vm993 = vcmask 1046532
      %vm994 = vmor %vm992, %vm993
      %v995 = vrot.slane %v968, 5
      %v996 = vrot.slane %v995, 4
      %v997 = vrot.slane %v649, 5
      %v998 = vsel %vm994, %v996, %v997
      %v999 = vrot.slane %v969, 5
      %v1000 = vrot.slane %v999, 4
      %v1001 = vrot.slane %v650, 5
      %v1002 = vsel %vm994, %v1000, %v1001
      %v1003 = vrot.slane %v970, 5
      %v1004 = vrot.slane %v1003, 4
      %v1005 = vrot.slane %v651, 5
      %v1006 = vsel %vm994, %v1004, %v1005
      %v1007 = vrot.slane %v971, 5
      %v1008 = vrot.slane %v1007, 4
      %v1009 = vrot.slane %v652, 5
      %v1010 = vsel %vm994, %v1008, %v1009
      %v1011 = vrot.slane %v972, 5
      %v1012 = vrot.slane %v1011, 4
      %v1013 = vrot.slane %v653, 5
      %v1014 = vsel %vm994, %v1012, %v1013
      %v1015 = vrot.slane %v973, 5
      %v1016 = vrot.slane %v1015, 4
      %v1017 = vrot.slane %v654, 5
      %v1018 = vsel %vm994, %v1016, %v1017
      %v1019 = vrot.slane %v974, 5
      %v1020 = vrot.slane %v1019, 4
      %v1021 = vrot.slane %v655, 5
      %v1022 = vsel %vm994, %v1020, %v1021
      %v1023 = vrot.slane %v975, 5
      %v1024 = vrot.slane %v1023, 4
      %v1025 = vrot.slane %v656, 5
      %v1026 = vsel %vm994, %v1024, %v1025
      %s1027 = scalar_lea.vmem %s3, 8
      %v1028 = vld [vmem:[%s1027] sm:$0xf]
      %v1029 = vunpack.c.l.b16 %v998
      %v1030 = vunpack.c.l.b16 %v1002
      %v1031 = vunpack.c.l.b16 %v1006
      %v1032 = vunpack.c.l.b16 %v1010
      %v1033 = vunpack.c.l.b16 %v1014
      %v1034 = vunpack.c.l.b16 %v1018
      %v1035 = vunpack.c.l.b16 %v1022
      %v1036 = vunpack.c.l.b16 %v1026
      %v1037 = vpack.c.b16 %v1030, %v1029
      %v1038 = vpack.c.b16 %v1032, %v1031
      %v1039 = vpack.c.b16 %v1034, %v1033
      %v1040 = vpack.c.b16 %v1036, %v1035
      %v1042 = vsel %vm786, %v1037, 0
      %v1045 = vsel %vm786, %v1038, 0
      %v1048 = vsel %vm786, %v1039, 0
      %v1051 = vsel %vm786, %v1040, 0
      %v1054 = vsel %vm799, %v1028, 0
      %1056 = vmatprep.subr.bf16.mxu0 0
      %1057 = vmatpush1.bf16.msra.mxu0 0
      %1058 = vmatprep.subr.bf16.mxu0 0
      %1059 = vmatpush1.bf16.msra.mxu0 0
      %1060 = vmatprep.subr.bf16.mxu0 0
      %1061 = vmatpush1.bf16.msra.mxu0 0
      %1062 = vmatprep.subr.bf16.mxu0 0
      %1063 = vmatpush1.bf16.msra.mxu0 0
      %1064 = vmatprep.subr.bf16.mxu0 0
      %1065 = vmatpush1.bf16.msra.mxu0 0
      %1066 = vmatprep.subr.bf16.mxu0 0
      %1067 = vmatpush1.bf16.msra.mxu0 0
      %1068 = vmatprep.subr.bf16.mxu0 0
      %1069 = vmatpush1.bf16.msra.mxu0 0
      %1070 = vmatprep.subr.bf16.mxu0 0
      %1071 = vmatpush1.bf16.msra.mxu0 %v1054
      %1072 = vmatprep.subr.bf16.mxu0 0
      %1073 = vmatpush2.bf16.msra.mxu0 0
      %1074 = vmatprep.subr.bf16.mxu0 0
      %1075 = vmatpush2.bf16.msra.mxu0 0
      %1076 = vmatprep.subr.bf16.mxu0 0
      %1077 = vmatpush2.bf16.msra.mxu0 0
      %1078 = vmatprep.subr.bf16.mxu0 0
      %1079 = vmatpush2.bf16.msra.mxu0 0
      %1080 = vmatprep.subr.bf16.mxu0 0
      %1081 = vmatpush2.bf16.msra.mxu0 0
      %1082 = vmatprep.subr.bf16.mxu0 0
      %1083 = vmatpush2.bf16.msra.mxu0 0
      %1084 = vmatprep.subr.bf16.mxu0 0
      %1085 = vmatpush2.bf16.msra.mxu0 0
      %1086 = vmatprep.subr.bf16.mxu0 0
      %1087 = vmatpush2.bf16.msra.mxu0 0
      %1088 = vmatprep.mubr.bf16.mxu0 0
      %1089 = vmatmul.mubr.bf16.gmra.mxu0 %v1042
      %v1090 = vpop.f32.mrf.mxu0
      %v1091 = vadd.f32 0.0, %v1090
      %v1092 = vpop.f32.mrf.mxu0
      %v1093 = vpop.f32.mrf.mxu0
      %v1094 = vadd.f32 0.0, %v1093
      %v1095 = vpop.f32.mrf.mxu0
      %1096 = vmatprep.mubr.bf16.mxu0 0
      %1097 = vmatmul.mubr.bf16.gmra.mxu0 %v1045
      %v1098 = vpop.f32.mrf.mxu0
      %v1099 = vadd.f32 0.0, %v1098
      %v1100 = vpop.f32.mrf.mxu0
      %v1101 = vpop.f32.mrf.mxu0
      %v1102 = vadd.f32 0.0, %v1101
      %v1103 = vpop.f32.mrf.mxu0
      %1104 = vmatprep.mubr.bf16.mxu0 0
      %1105 = vmatmul.mubr.bf16.gmra.mxu0 %v1048
      %v1106 = vpop.f32.mrf.mxu0
      %v1107 = vadd.f32 0.0, %v1106
      %v1108 = vpop.f32.mrf.mxu0
      %v1109 = vpop.f32.mrf.mxu0
      %v1110 = vadd.f32 0.0, %v1109
      %v1111 = vpop.f32.mrf.mxu0
      %1112 = vmatprep.mubr.bf16.mxu0 0
      %1113 = vmatmul.mubr.bf16.gmra.mxu0 %v1051
      %v1114 = vpop.f32.mrf.mxu0
      %v1115 = vadd.f32 0.0, %v1114
      %v1116 = vpop.f32.mrf.mxu0
      %v1117 = vpop.f32.mrf.mxu0
      %v1118 = vadd.f32 0.0, %v1117
      %v1119 = vpop.f32.mrf.mxu0
      %1120 = vdwg.mxu0
      %v1121 = vadd.f32 %v938, %v1091
      %v1122 = vadd.f32 %v941, %v1094
      %v1123 = vadd.f32 %v946, %v1099
      %v1124 = vadd.f32 %v949, %v1102
      %v1125 = vadd.f32 %v954, %v1107
      %v1126 = vadd.f32 %v957, %v1110
      %v1127 = vadd.f32 %v962, %v1115
      %v1128 = vadd.f32 %v965, %v1118
      %v1129 = vld [vmem:[%s529] sm:$0xf]
      %v1130 = vld [vmem:[%s529 + $0x8] sm:$0xf]
      %v1131 = vld [vmem:[%s529 + $0x10] sm:$0xf]
      %v1132 = vld [vmem:[%s529 + $0x18] sm:$0xf]
      %v1133 = vld [vmem:[%s529 + $0x20] sm:$0xf]
      %v1134 = vld [vmem:[%s529 + $0x28] sm:$0xf]
      %v1135 = vld [vmem:[%s529 + $0x30] sm:$0xf]
      %v1136 = vld [vmem:[%s529 + $0x38] sm:$0xf]
      %s1137 = scalar_lea.vmem %s3, 12
      %v1138 = vld [vmem:[%s1137] sm:$0xf]
      %v1147 = vunpack.c.l.b16 %v1129
      %v1148 = vunpack.c.l.b16 %v1130
      %v1149 = vunpack.c.l.b16 %v1131
      %v1150 = vunpack.c.l.b16 %v1132
      %v1151 = vunpack.c.l.b16 %v1133
      %v1152 = vunpack.c.l.b16 %v1134
      %v1153 = vunpack.c.l.b16 %v1135
      %v1154 = vunpack.c.l.b16 %v1136
      %v1155 = vpack.c.b16 %v1148, %v1147
      %v1156 = vpack.c.b16 %v1150, %v1149
      %v1157 = vpack.c.b16 %v1152, %v1151
      %v1158 = vpack.c.b16 %v1154, %v1153
      %v1160 = vsel %vm786, %v1155, 0
      %v1163 = vsel %vm786, %v1156, 0
      %v1166 = vsel %vm786, %v1157, 0
      %v1169 = vsel %vm786, %v1158, 0
      %v1172 = vsel %vm799, %v1138, 0
      %1174 = vmatprep.subr.bf16.mxu0 0
      %1175 = vmatpush1.bf16.msra.mxu0 0
      %1176 = vmatprep.subr.bf16.mxu0 0
      %1177 = vmatpush1.bf16.msra.mxu0 0
      %1178 = vmatprep.subr.bf16.mxu0 0
      %1179 = vmatpush1.bf16.msra.mxu0 0
      %1180 = vmatprep.subr.bf16.mxu0 0
      %1181 = vmatpush1.bf16.msra.mxu0 0
      %1182 = vmatprep.subr.bf16.mxu0 0
      %1183 = vmatpush1.bf16.msra.mxu0 0
      %1184 = vmatprep.subr.bf16.mxu0 0
      %1185 = vmatpush1.bf16.msra.mxu0 0
      %1186 = vmatprep.subr.bf16.mxu0 0
      %1187 = vmatpush1.bf16.msra.mxu0 0
      %1188 = vmatprep.subr.bf16.mxu0 0
      %1189 = vmatpush1.bf16.msra.mxu0 %v1172
      %1190 = vmatprep.subr.bf16.mxu0 0
      %1191 = vmatpush2.bf16.msra.mxu0 0
      %1192 = vmatprep.subr.bf16.mxu0 0
      %1193 = vmatpush2.bf16.msra.mxu0 0
      %1194 = vmatprep.subr.bf16.mxu0 0
      %1195 = vmatpush2.bf16.msra.mxu0 0
      %1196 = vmatprep.subr.bf16.mxu0 0
      %1197 = vmatpush2.bf16.msra.mxu0 0
      %1198 = vmatprep.subr.bf16.mxu0 0
      %1199 = vmatpush2.bf16.msra.mxu0 0
      %1200 = vmatprep.subr.bf16.mxu0 0
      %1201 = vmatpush2.bf16.msra.mxu0 0
      %1202 = vmatprep.subr.bf16.mxu0 0
      %1203 = vmatpush2.bf16.msra.mxu0 0
      %1204 = vmatprep.subr.bf16.mxu0 0
      %1205 = vmatpush2.bf16.msra.mxu0 0
      %1206 = vmatprep.mubr.bf16.mxu0 0
      %1207 = vmatmul.mubr.bf16.gmra.mxu0 %v1160
      %v1208 = vpop.f32.mrf.mxu0
      %v1209 = vadd.f32 0.0, %v1208
      %v1210 = vpop.f32.mrf.mxu0
      %v1211 = vpop.f32.mrf.mxu0
      %v1212 = vadd.f32 0.0, %v1211
      %v1213 = vpop.f32.mrf.mxu0
      %1214 = vmatprep.mubr.bf16.mxu0 0
      %1215 = vmatmul.mubr.bf16.gmra.mxu0 %v1163
      %v1216 = vpop.f32.mrf.mxu0
      %v1217 = vadd.f32 0.0, %v1216
      %v1218 = vpop.f32.mrf.mxu0
      %v1219 = vpop.f32.mrf.mxu0
      %v1220 = vadd.f32 0.0, %v1219
      %v1221 = vpop.f32.mrf.mxu0
      %1222 = vmatprep.mubr.bf16.mxu0 0
      %1223 = vmatmul.mubr.bf16.gmra.mxu0 %v1166
      %v1224 = vpop.f32.mrf.mxu0
      %v1225 = vadd.f32 0.0, %v1224
      %v1226 = vpop.f32.mrf.mxu0
      %v1227 = vpop.f32.mrf.mxu0
      %v1228 = vadd.f32 0.0, %v1227
      %v1229 = vpop.f32.mrf.mxu0
      %1230 = vmatprep.mubr.bf16.mxu0 0
      %1231 = vmatmul.mubr.bf16.gmra.mxu0 %v1169
      %v1232 = vpop.f32.mrf.mxu0
      %v1233 = vadd.f32 0.0, %v1232
      %v1234 = vpop.f32.mrf.mxu0
      %v1235 = vpop.f32.mrf.mxu0
      %v1236 = vadd.f32 0.0, %v1235
      %v1237 = vpop.f32.mrf.mxu0
      %1238 = vdwg.mxu0
      %v1239 = vadd.f32 %v1121, %v1209
      %v1240 = vadd.f32 %v1122, %v1212
      %v1241 = vadd.f32 %v1123, %v1217
      %v1242 = vadd.f32 %v1124, %v1220
      %v1243 = vadd.f32 %v1125, %v1225
      %v1244 = vadd.f32 %v1126, %v1228
      %v1245 = vadd.f32 %v1127, %v1233
      %v1246 = vadd.f32 %v1128, %v1236
      %v1247 = vld [vmem:[%s529] sm:$0xf]
      %v1248 = vld [vmem:[%s529 + $0x4] sm:$0x1]
      %v1249 = vld [vmem:[%s529 + $0x8] sm:$0xf]
      %v1250 = vld [vmem:[%s529 + $0xc] sm:$0x1]
      %v1251 = vld [vmem:[%s529 + $0x10] sm:$0xf]
      %v1252 = vld [vmem:[%s529 + $0x14] sm:$0x1]
      %v1253 = vld [vmem:[%s529 + $0x18] sm:$0xf]
      %v1254 = vld [vmem:[%s529 + $0x1c] sm:$0x1]
      %v1255 = vld [vmem:[%s529 + $0x20] sm:$0xf]
      %v1256 = vld [vmem:[%s529 + $0x24] sm:$0x1]
      %v1257 = vld [vmem:[%s529 + $0x28] sm:$0xf]
      %v1258 = vld [vmem:[%s529 + $0x2c] sm:$0x1]
      %v1259 = vld [vmem:[%s529 + $0x30] sm:$0xf]
      %v1260 = vld [vmem:[%s529 + $0x34] sm:$0x1]
      %v1261 = vld [vmem:[%s529 + $0x38] sm:$0xf]
      %v1262 = vld [vmem:[%s529 + $0x3c] sm:$0x1]
      %v1264 = vshrl.u32 %v1247, 16
      %v1266 = vrot.slane %v1264, 4
      %v1267 = vshll.u32 %v1247, 16
      %v1269 = vrot.slane %v1267, 5
      %v1270 = vor.u32 %v1266, %v1269
      %v1271 = vrot.slane %v1270, 4
      %v1273 = vshll.u32 %v1248, 16
      %v1275 = vrot.slane %v1273, 5
      %v1276 = vsel %vm659, %v1271, %v1275
      %v1278 = vshrl.u32 %v1249, 16
      %v1280 = vrot.slane %v1278, 4
      %v1281 = vshll.u32 %v1249, 16
      %v1283 = vrot.slane %v1281, 5
      %v1284 = vor.u32 %v1280, %v1283
      %v1285 = vrot.slane %v1284, 4
      %v1287 = vshll.u32 %v1250, 16
      %v1289 = vrot.slane %v1287, 5
      %v1290 = vsel %vm659, %v1285, %v1289
      %v1292 = vshrl.u32 %v1251, 16
      %v1294 = vrot.slane %v1292, 4
      %v1295 = vshll.u32 %v1251, 16
      %v1297 = vrot.slane %v1295, 5
      %v1298 = vor.u32 %v1294, %v1297
      %v1299 = vrot.slane %v1298, 4
      %v1301 = vshll.u32 %v1252, 16
      %v1303 = vrot.slane %v1301, 5
      %v1304 = vsel %vm659, %v1299, %v1303
      %v1306 = vshrl.u32 %v1253, 16
      %v1308 = vrot.slane %v1306, 4
      %v1309 = vshll.u32 %v1253, 16
      %v1311 = vrot.slane %v1309, 5
      %v1312 = vor.u32 %v1308, %v1311
      %v1313 = vrot.slane %v1312, 4
      %v1315 = vshll.u32 %v1254, 16
      %v1317 = vrot.slane %v1315, 5
      %v1318 = vsel %vm659, %v1313, %v1317
      %v1320 = vshrl.u32 %v1255, 16
      %v1322 = vrot.slane %v1320, 4
      %v1323 = vshll.u32 %v1255, 16
      %v1325 = vrot.slane %v1323, 5
      %v1326 = vor.u32 %v1322, %v1325
      %v1327 = vrot.slane %v1326, 4
      %v1329 = vshll.u32 %v1256, 16
      %v1331 = vrot.slane %v1329, 5
      %v1332 = vsel %vm659, %v1327, %v1331
      %v1334 = vshrl.u32 %v1257, 16
      %v1336 = vrot.slane %v1334, 4
      %v1337 = vshll.u32 %v1257, 16
      %v1339 = vrot.slane %v1337, 5
      %v1340 = vor.u32 %v1336, %v1339
      %v1341 = vrot.slane %v1340, 4
      %v1343 = vshll.u32 %v1258, 16
      %v1345 = vrot.slane %v1343, 5
      %v1346 = vsel %vm659, %v1341, %v1345
      %v1348 = vshrl.u32 %v1259, 16
      %v1350 = vrot.slane %v1348, 4
      %v1351 = vshll.u32 %v1259, 16
      %v1353 = vrot.slane %v1351, 5
      %v1354 = vor.u32 %v1350, %v1353
      %v1355 = vrot.slane %v1354, 4
      %v1357 = vshll.u32 %v1260, 16
      %v1359 = vrot.slane %v1357, 5
      %v1360 = vsel %vm659, %v1355, %v1359
      %v1362 = vshrl.u32 %v1261, 16
      %v1364 = vrot.slane %v1362, 4
      %v1365 = vshll.u32 %v1261, 16
      %v1367 = vrot.slane %v1365, 5
      %v1368 = vor.u32 %v1364, %v1367
      %v1369 = vrot.slane %v1368, 4
      %v1371 = vshll.u32 %v1262, 16
      %v1373 = vrot.slane %v1371, 5
      %v1374 = vsel %vm659, %v1369, %v1373
      %s1375 = scalar_lea.vmem %s3, 16
      %v1376 = vld [vmem:[%s1375] sm:$0xf]
      %v1377 = vunpack.c.l.b16 %v1276
      %v1378 = vunpack.c.l.b16 %v1290
      %v1379 = vunpack.c.l.b16 %v1304
      %v1380 = vunpack.c.l.b16 %v1318
      %v1381 = vunpack.c.l.b16 %v1332
      %v1382 = vunpack.c.l.b16 %v1346
      %v1383 = vunpack.c.l.b16 %v1360
      %v1384 = vunpack.c.l.b16 %v1374
      %v1385 = vpack.c.b16 %v1378, %v1377
      %v1386 = vpack.c.b16 %v1380, %v1379
      %v1387 = vpack.c.b16 %v1382, %v1381
      %v1388 = vpack.c.b16 %v1384, %v1383
      %v1390 = vsel %vm786, %v1385, 0
      %v1393 = vsel %vm786, %v1386, 0
      %v1396 = vsel %vm786, %v1387, 0
      %v1399 = vsel %vm786, %v1388, 0
      %v1402 = vsel %vm799, %v1376, 0
      %1404 = vmatprep.subr.bf16.mxu0 0
      %1405 = vmatpush1.bf16.msra.mxu0 0
      %1406 = vmatprep.subr.bf16.mxu0 0
      %1407 = vmatpush1.bf16.msra.mxu0 0
      %1408 = vmatprep.subr.bf16.mxu0 0
      %1409 = vmatpush1.bf16.msra.mxu0 0
      %1410 = vmatprep.subr.bf16.mxu0 0
      %1411 = vmatpush1.bf16.msra.mxu0 0
      %1412 = vmatprep.subr.bf16.mxu0 0
      %1413 = vmatpush1.bf16.msra.mxu0 0
      %1414 = vmatprep.subr.bf16.mxu0 0
      %1415 = vmatpush1.bf16.msra.mxu0 0
      %1416 = vmatprep.subr.bf16.mxu0 0
      %1417 = vmatpush1.bf16.msra.mxu0 0
      %1418 = vmatprep.subr.bf16.mxu0 0
      %1419 = vmatpush1.bf16.msra.mxu0 %v1402
      %1420 = vmatprep.subr.bf16.mxu0 0
      %1421 = vmatpush2.bf16.msra.mxu0 0
      %1422 = vmatprep.subr.bf16.mxu0 0
      %1423 = vmatpush2.bf16.msra.mxu0 0
      %1424 = vmatprep.subr.bf16.mxu0 0
      %1425 = vmatpush2.bf16.msra.mxu0 0
      %1426 = vmatprep.subr.bf16.mxu0 0
      %1427 = vmatpush2.bf16.msra.mxu0 0
      %1428 = vmatprep.subr.bf16.mxu0 0
      %1429 = vmatpush2.bf16.msra.mxu0 0
      %1430 = vmatprep.subr.bf16.mxu0 0
      %1431 = vmatpush2.bf16.msra.mxu0 0
      %1432 = vmatprep.subr.bf16.mxu0 0
      %1433 = vmatpush2.bf16.msra.mxu0 0
      %1434 = vmatprep.subr.bf16.mxu0 0
      %1435 = vmatpush2.bf16.msra.mxu0 0
      %1436 = vmatprep.mubr.bf16.mxu0 0
      %1437 = vmatmul.mubr.bf16.gmra.mxu0 %v1390
      %v1438 = vpop.f32.mrf.mxu0
      %v1439 = vadd.f32 0.0, %v1438
      %v1440 = vpop.f32.mrf.mxu0
      %v1441 = vpop.f32.mrf.mxu0
      %v1442 = vadd.f32 0.0, %v1441
      %v1443 = vpop.f32.mrf.mxu0
      %1444 = vmatprep.mubr.bf16.mxu0 0
      %1445 = vmatmul.mubr.bf16.gmra.mxu0 %v1393
      %v1446 = vpop.f32.mrf.mxu0
      %v1447 = vadd.f32 0.0, %v1446
      %v1448 = vpop.f32.mrf.mxu0
      %v1449 = vpop.f32.mrf.mxu0
      %v1450 = vadd.f32 0.0, %v1449
      %v1451 = vpop.f32.mrf.mxu0
      %1452 = vmatprep.mubr.bf16.mxu0 0
      %1453 = vmatmul.mubr.bf16.gmra.mxu0 %v1396
      %v1454 = vpop.f32.mrf.mxu0
      %v1455 = vadd.f32 0.0, %v1454
      %v1456 = vpop.f32.mrf.mxu0
      %v1457 = vpop.f32.mrf.mxu0
      %v1458 = vadd.f32 0.0, %v1457
      %v1459 = vpop.f32.mrf.mxu0
      %1460 = vmatprep.mubr.bf16.mxu0 0
      %1461 = vmatmul.mubr.bf16.gmra.mxu0 %v1399
      %v1462 = vpop.f32.mrf.mxu0
      %v1463 = vadd.f32 0.0, %v1462
      %v1464 = vpop.f32.mrf.mxu0
      %v1465 = vpop.f32.mrf.mxu0
      %v1466 = vadd.f32 0.0, %v1465
      %v1467 = vpop.f32.mrf.mxu0
      %1468 = vdwg.mxu0
      %v1469 = vadd.f32 %v1239, %v1439
      %v1470 = vadd.f32 %v1240, %v1442
      %v1471 = vadd.f32 %v1241, %v1447
      %v1472 = vadd.f32 %v1242, %v1450
      %v1473 = vadd.f32 %v1243, %v1455
      %v1474 = vadd.f32 %v1244, %v1458
      %v1475 = vadd.f32 %v1245, %v1463
      %v1476 = vadd.f32 %v1246, %v1466
      %v1477 = vld [vmem:[%s529] sm:$0xe]
      %v1478 = vld [vmem:[%s529 + $0x8] sm:$0xe]
      %v1479 = vld [vmem:[%s529 + $0x10] sm:$0xe]
      %v1480 = vld [vmem:[%s529 + $0x18] sm:$0xe]
      %v1481 = vld [vmem:[%s529 + $0x20] sm:$0xe]
      %v1482 = vld [vmem:[%s529 + $0x28] sm:$0xe]
      %v1483 = vld [vmem:[%s529 + $0x30] sm:$0xe]
      %v1484 = vld [vmem:[%s529 + $0x38] sm:$0xe]
      %v1501 = vrot.slane %v1477, 5
      %v1502 = vrot.slane %v1501, 4
      %v1503 = vrot.slane %v1248, 5
      %v1504 = vsel %vm994, %v1502, %v1503
      %v1505 = vrot.slane %v1478, 5
      %v1506 = vrot.slane %v1505, 4
      %v1507 = vrot.slane %v1250, 5
      %v1508 = vsel %vm994, %v1506, %v1507
      %v1509 = vrot.slane %v1479, 5
      %v1510 = vrot.slane %v1509, 4
      %v1511 = vrot.slane %v1252, 5
      %v1512 = vsel %vm994, %v1510, %v1511
      %v1513 = vrot.slane %v1480, 5
      %v1514 = vrot.slane %v1513, 4
      %v1515 = vrot.slane %v1254, 5
      %v1516 = vsel %vm994, %v1514, %v1515
      %v1517 = vrot.slane %v1481, 5
      %v1518 = vrot.slane %v1517, 4
      %v1519 = vrot.slane %v1256, 5
      %v1520 = vsel %vm994, %v1518, %v1519
      %v1521 = vrot.slane %v1482, 5
      %v1522 = vrot.slane %v1521, 4
      %v1523 = vrot.slane %v1258, 5
      %v1524 = vsel %vm994, %v1522, %v1523
      %v1525 = vrot.slane %v1483, 5
      %v1526 = vrot.slane %v1525, 4
      %v1527 = vrot.slane %v1260, 5
      %v1528 = vsel %vm994, %v1526, %v1527
      %v1529 = vrot.slane %v1484, 5
      %v1530 = vrot.slane %v1529, 4
      %v1531 = vrot.slane %v1262, 5
      %v1532 = vsel %vm994, %v1530, %v1531
      %s1533 = scalar_lea.vmem %s3, 20
      %v1534 = vld [vmem:[%s1533] sm:$0xf]
      %v1535 = vunpack.c.l.b16 %v1504
      %v1536 = vunpack.c.l.b16 %v1508
      %v1537 = vunpack.c.l.b16 %v1512
      %v1538 = vunpack.c.l.b16 %v1516
      %v1539 = vunpack.c.l.b16 %v1520
      %v1540 = vunpack.c.l.b16 %v1524
      %v1541 = vunpack.c.l.b16 %v1528
      %v1542 = vunpack.c.l.b16 %v1532
      %v1543 = vpack.c.b16 %v1536, %v1535
      %v1544 = vpack.c.b16 %v1538, %v1537
      %v1545 = vpack.c.b16 %v1540, %v1539
      %v1546 = vpack.c.b16 %v1542, %v1541
      %v1548 = vsel %vm786, %v1543, 0
      %v1551 = vsel %vm786, %v1544, 0
      %v1554 = vsel %vm786, %v1545, 0
      %v1557 = vsel %vm786, %v1546, 0
      %v1560 = vsel %vm799, %v1534, 0
      %1562 = vmatprep.subr.bf16.mxu0 0
      %1563 = vmatpush1.bf16.msra.mxu0 0
      %1564 = vmatprep.subr.bf16.mxu0 0
      %1565 = vmatpush1.bf16.msra.mxu0 0
      %1566 = vmatprep.subr.bf16.mxu0 0
      %1567 = vmatpush1.bf16.msra.mxu0 0
      %1568 = vmatprep.subr.bf16.mxu0 0
      %1569 = vmatpush1.bf16.msra.mxu0 0
      %1570 = vmatprep.subr.bf16.mxu0 0
      %1571 = vmatpush1.bf16.msra.mxu0 0
      %1572 = vmatprep.subr.bf16.mxu0 0
      %1573 = vmatpush1.bf16.msra.mxu0 0
      %1574 = vmatprep.subr.bf16.mxu0 0
      %1575 = vmatpush1.bf16.msra.mxu0 0
      %1576 = vmatprep.subr.bf16.mxu0 0
      %1577 = vmatpush1.bf16.msra.mxu0 %v1560
      %1578 = vmatprep.subr.bf16.mxu0 0
      %1579 = vmatpush2.bf16.msra.mxu0 0
      %1580 = vmatprep.subr.bf16.mxu0 0
      %1581 = vmatpush2.bf16.msra.mxu0 0
      %1582 = vmatprep.subr.bf16.mxu0 0
      %1583 = vmatpush2.bf16.msra.mxu0 0
      %1584 = vmatprep.subr.bf16.mxu0 0
      %1585 = vmatpush2.bf16.msra.mxu0 0
      %1586 = vmatprep.subr.bf16.mxu0 0
      %1587 = vmatpush2.bf16.msra.mxu0 0
      %1588 = vmatprep.subr.bf16.mxu0 0
      %1589 = vmatpush2.bf16.msra.mxu0 0
      %1590 = vmatprep.subr.bf16.mxu0 0
      %1591 = vmatpush2.bf16.msra.mxu0 0
      %1592 = vmatprep.subr.bf16.mxu0 0
      %1593 = vmatpush2.bf16.msra.mxu0 0
      %1594 = vmatprep.mubr.bf16.mxu0 0
      %1595 = vmatmul.mubr.bf16.gmra.mxu0 %v1548
      %v1596 = vpop.f32.mrf.mxu0
      %v1597 = vadd.f32 0.0, %v1596
      %v1598 = vpop.f32.mrf.mxu0
      %v1599 = vpop.f32.mrf.mxu0
      %v1600 = vadd.f32 0.0, %v1599
      %v1601 = vpop.f32.mrf.mxu0
      %1602 = vmatprep.mubr.bf16.mxu0 0
      %1603 = vmatmul.mubr.bf16.gmra.mxu0 %v1551
      %v1604 = vpop.f32.mrf.mxu0
      %v1605 = vadd.f32 0.0, %v1604
      %v1606 = vpop.f32.mrf.mxu0
      %v1607 = vpop.f32.mrf.mxu0
      %v1608 = vadd.f32 0.0, %v1607
      %v1609 = vpop.f32.mrf.mxu0
      %1610 = vmatprep.mubr.bf16.mxu0 0
      %1611 = vmatmul.mubr.bf16.gmra.mxu0 %v1554
      %v1612 = vpop.f32.mrf.mxu0
      %v1613 = vadd.f32 0.0, %v1612
      %v1614 = vpop.f32.mrf.mxu0
      %v1615 = vpop.f32.mrf.mxu0
      %v1616 = vadd.f32 0.0, %v1615
      %v1617 = vpop.f32.mrf.mxu0
      %1618 = vmatprep.mubr.bf16.mxu0 0
      %1619 = vmatmul.mubr.bf16.gmra.mxu0 %v1557
      %v1620 = vpop.f32.mrf.mxu0
      %v1621 = vadd.f32 0.0, %v1620
      %v1622 = vpop.f32.mrf.mxu0
      %v1623 = vpop.f32.mrf.mxu0
      %v1624 = vadd.f32 0.0, %v1623
      %v1625 = vpop.f32.mrf.mxu0
      %1626 = vdwg.mxu0
      %v1627 = vadd.f32 %v1469, %v1597
      %v1628 = vadd.f32 %v1470, %v1600
      %v1629 = vadd.f32 %v1471, %v1605
      %v1630 = vadd.f32 %v1472, %v1608
      %v1631 = vadd.f32 %v1473, %v1613
      %v1632 = vadd.f32 %v1474, %v1616
      %v1633 = vadd.f32 %v1475, %v1621
      %v1634 = vadd.f32 %v1476, %v1624
      %s1635 = scalar_lea.vmem [#allocation2], 16
      %v1636 = vld [vmem:[%s1635] sm:$0xf]
      %v1637 = vld [vmem:[%s1635 + $0x8] sm:$0xf]
      %v1638 = vld [vmem:[%s1635 + $0x10] sm:$0xf]
      %v1639 = vld [vmem:[%s1635 + $0x18] sm:$0xf]
      %v1640 = vld [vmem:[%s1635 + $0x20] sm:$0xf]
      %v1641 = vld [vmem:[%s1635 + $0x28] sm:$0xf]
      %v1642 = vld [vmem:[%s1635 + $0x30] sm:$0xf]
      %v1643 = vld [vmem:[%s1635 + $0x38] sm:$0xf]
      %s1644 = scalar_lea.vmem %s3, 24
      %v1645 = vld [vmem:[%s1644] sm:$0xf]
      %v1654 = vunpack.c.l.b16 %v1636
      %v1655 = vunpack.c.l.b16 %v1637
      %v1656 = vunpack.c.l.b16 %v1638
      %v1657 = vunpack.c.l.b16 %v1639
      %v1658 = vunpack.c.l.b16 %v1640
      %v1659 = vunpack.c.l.b16 %v1641
      %v1660 = vunpack.c.l.b16 %v1642
      %v1661 = vunpack.c.l.b16 %v1643
      %v1662 = vpack.c.b16 %v1655, %v1654
      %v1663 = vpack.c.b16 %v1657, %v1656
      %v1664 = vpack.c.b16 %v1659, %v1658
      %v1665 = vpack.c.b16 %v1661, %v1660
      %v1667 = vsel %vm786, %v1662, 0
      %v1670 = vsel %vm786, %v1663, 0
      %v1673 = vsel %vm786, %v1664, 0
      %v1676 = vsel %vm786, %v1665, 0
      %v1679 = vsel %vm799, %v1645, 0
      %1681 = vmatprep.subr.bf16.mxu0 0
      %1682 = vmatpush1.bf16.msra.mxu0 0
      %1683 = vmatprep.subr.bf16.mxu0 0
      %1684 = vmatpush1.bf16.msra.mxu0 0
      %1685 = vmatprep.subr.bf16.mxu0 0
      %1686 = vmatpush1.bf16.msra.mxu0 0
      %1687 = vmatprep.subr.bf16.mxu0 0
      %1688 = vmatpush1.bf16.msra.mxu0 0
      %1689 = vmatprep.subr.bf16.mxu0 0
      %1690 = vmatpush1.bf16.msra.mxu0 0
      %1691 = vmatprep.subr.bf16.mxu0 0
      %1692 = vmatpush1.bf16.msra.mxu0 0
      %1693 = vmatprep.subr.bf16.mxu0 0
      %1694 = vmatpush1.bf16.msra.mxu0 0
      %1695 = vmatprep.subr.bf16.mxu0 0
      %1696 = vmatpush1.bf16.msra.mxu0 %v1679
      %1697 = vmatprep.subr.bf16.mxu0 0
      %1698 = vmatpush2.bf16.msra.mxu0 0
      %1699 = vmatprep.subr.bf16.mxu0 0
      %1700 = vmatpush2.bf16.msra.mxu0 0
      %1701 = vmatprep.subr.bf16.mxu0 0
      %1702 = vmatpush2.bf16.msra.mxu0 0
      %1703 = vmatprep.subr.bf16.mxu0 0
      %1704 = vmatpush2.bf16.msra.mxu0 0
      %1705 = vmatprep.subr.bf16.mxu0 0
      %1706 = vmatpush2.bf16.msra.mxu0 0
      %1707 = vmatprep.subr.bf16.mxu0 0
      %1708 = vmatpush2.bf16.msra.mxu0 0
      %1709 = vmatprep.subr.bf16.mxu0 0
      %1710 = vmatpush2.bf16.msra.mxu0 0
      %1711 = vmatprep.subr.bf16.mxu0 0
      %1712 = vmatpush2.bf16.msra.mxu0 0
      %1713 = vmatprep.mubr.bf16.mxu0 0
      %1714 = vmatmul.mubr.bf16.gmra.mxu0 %v1667
      %v1715 = vpop.f32.mrf.mxu0
      %v1716 = vadd.f32 0.0, %v1715
      %v1717 = vpop.f32.mrf.mxu0
      %v1718 = vpop.f32.mrf.mxu0
      %v1719 = vadd.f32 0.0, %v1718
      %v1720 = vpop.f32.mrf.mxu0
      %1721 = vmatprep.mubr.bf16.mxu0 0
      %1722 = vmatmul.mubr.bf16.gmra.mxu0 %v1670
      %v1723 = vpop.f32.mrf.mxu0
      %v1724 = vadd.f32 0.0, %v1723
      %v1725 = vpop.f32.mrf.mxu0
      %v1726 = vpop.f32.mrf.mxu0
      %v1727 = vadd.f32 0.0, %v1726
      %v1728 = vpop.f32.mrf.mxu0
      %1729 = vmatprep.mubr.bf16.mxu0 0
      %1730 = vmatmul.mubr.bf16.gmra.mxu0 %v1673
      %v1731 = vpop.f32.mrf.mxu0
      %v1732 = vadd.f32 0.0, %v1731
      %v1733 = vpop.f32.mrf.mxu0
      %v1734 = vpop.f32.mrf.mxu0
      %v1735 = vadd.f32 0.0, %v1734
      %v1736 = vpop.f32.mrf.mxu0
      %1737 = vmatprep.mubr.bf16.mxu0 0
      %1738 = vmatmul.mubr.bf16.gmra.mxu0 %v1676
      %v1739 = vpop.f32.mrf.mxu0
      %v1740 = vadd.f32 0.0, %v1739
      %v1741 = vpop.f32.mrf.mxu0
      %v1742 = vpop.f32.mrf.mxu0
      %v1743 = vadd.f32 0.0, %v1742
      %v1744 = vpop.f32.mrf.mxu0
      %1745 = vdwg.mxu0
      %v1746 = vadd.f32 %v1627, %v1716
      %v1747 = vadd.f32 %v1628, %v1719
      %v1748 = vadd.f32 %v1629, %v1724
      %v1749 = vadd.f32 %v1630, %v1727
      %v1750 = vadd.f32 %v1631, %v1732
      %v1751 = vadd.f32 %v1632, %v1735
      %v1752 = vadd.f32 %v1633, %v1740
      %v1753 = vadd.f32 %v1634, %v1743
      %v1754 = vld [vmem:[%s1635] sm:$0xf]
      %v1755 = vld [vmem:[%s1635 + $0x4] sm:$0x1]
      %v1756 = vld [vmem:[%s1635 + $0x8] sm:$0xf]
      %v1757 = vld [vmem:[%s1635 + $0xc] sm:$0x1]
      %v1758 = vld [vmem:[%s1635 + $0x10] sm:$0xf]
      %v1759 = vld [vmem:[%s1635 + $0x14] sm:$0x1]
      %v1760 = vld [vmem:[%s1635 + $0x18] sm:$0xf]
      %v1761 = vld [vmem:[%s1635 + $0x1c] sm:$0x1]
      %v1762 = vld [vmem:[%s1635 + $0x20] sm:$0xf]
      %v1763 = vld [vmem:[%s1635 + $0x24] sm:$0x1]
      %v1764 = vld [vmem:[%s1635 + $0x28] sm:$0xf]
      %v1765 = vld [vmem:[%s1635 + $0x2c] sm:$0x1]
      %v1766 = vld [vmem:[%s1635 + $0x30] sm:$0xf]
      %v1767 = vld [vmem:[%s1635 + $0x34] sm:$0x1]
      %v1768 = vld [vmem:[%s1635 + $0x38] sm:$0xf]
      %v1769 = vld [vmem:[%s1635 + $0x3c] sm:$0x1]
      %v1771 = vshrl.u32 %v1754, 16
      %v1773 = vrot.slane %v1771, 4
      %v1774 = vshll.u32 %v1754, 16
      %v1776 = vrot.slane %v1774, 5
      %v1777 = vor.u32 %v1773, %v1776
      %v1778 = vrot.slane %v1777, 4
      %v1780 = vshll.u32 %v1755, 16
      %v1782 = vrot.slane %v1780, 5
      %v1783 = vsel %vm659, %v1778, %v1782
      %v1785 = vshrl.u32 %v1756, 16
      %v1787 = vrot.slane %v1785, 4
      %v1788 = vshll.u32 %v1756, 16
      %v1790 = vrot.slane %v1788, 5
      %v1791 = vor.u32 %v1787, %v1790
      %v1792 = vrot.slane %v1791, 4
      %v1794 = vshll.u32 %v1757, 16
      %v1796 = vrot.slane %v1794, 5
      %v1797 = vsel %vm659, %v1792, %v1796
      %v1799 = vshrl.u32 %v1758, 16
      %v1801 = vrot.slane %v1799, 4
      %v1802 = vshll.u32 %v1758, 16
      %v1804 = vrot.slane %v1802, 5
      %v1805 = vor.u32 %v1801, %v1804
      %v1806 = vrot.slane %v1805, 4
      %v1808 = vshll.u32 %v1759, 16
      %v1810 = vrot.slane %v1808, 5
      %v1811 = vsel %vm659, %v1806, %v1810
      %v1813 = vshrl.u32 %v1760, 16
      %v1815 = vrot.slane %v1813, 4
      %v1816 = vshll.u32 %v1760, 16
      %v1818 = vrot.slane %v1816, 5
      %v1819 = vor.u32 %v1815, %v1818
      %v1820 = vrot.slane %v1819, 4
      %v1822 = vshll.u32 %v1761, 16
      %v1824 = vrot.slane %v1822, 5
      %v1825 = vsel %vm659, %v1820, %v1824
      %v1827 = vshrl.u32 %v1762, 16
      %v1829 = vrot.slane %v1827, 4
      %v1830 = vshll.u32 %v1762, 16
      %v1832 = vrot.slane %v1830, 5
      %v1833 = vor.u32 %v1829, %v1832
      %v1834 = vrot.slane %v1833, 4
      %v1836 = vshll.u32 %v1763, 16
      %v1838 = vrot.slane %v1836, 5
      %v1839 = vsel %vm659, %v1834, %v1838
      %v1841 = vshrl.u32 %v1764, 16
      %v1843 = vrot.slane %v1841, 4
      %v1844 = vshll.u32 %v1764, 16
      %v1846 = vrot.slane %v1844, 5
      %v1847 = vor.u32 %v1843, %v1846
      %v1848 = vrot.slane %v1847, 4
      %v1850 = vshll.u32 %v1765, 16
      %v1852 = vrot.slane %v1850, 5
      %v1853 = vsel %vm659, %v1848, %v1852
      %v1855 = vshrl.u32 %v1766, 16
      %v1857 = vrot.slane %v1855, 4
      %v1858 = vshll.u32 %v1766, 16
      %v1860 = vrot.slane %v1858, 5
      %v1861 = vor.u32 %v1857, %v1860
      %v1862 = vrot.slane %v1861, 4
      %v1864 = vshll.u32 %v1767, 16
      %v1866 = vrot.slane %v1864, 5
      %v1867 = vsel %vm659, %v1862, %v1866
      %v1869 = vshrl.u32 %v1768, 16
      %v1871 = vrot.slane %v1869, 4
      %v1872 = vshll.u32 %v1768, 16
      %v1874 = vrot.slane %v1872, 5
      %v1875 = vor.u32 %v1871, %v1874
      %v1876 = vrot.slane %v1875, 4
      %v1878 = vshll.u32 %v1769, 16
      %v1880 = vrot.slane %v1878, 5
      %v1881 = vsel %vm659, %v1876, %v1880
      %s1882 = scalar_lea.vmem %s3, 28
      %v1883 = vld [vmem:[%s1882] sm:$0xf]
      %v1884 = vunpack.c.l.b16 %v1783
      %v1885 = vunpack.c.l.b16 %v1797
      %v1886 = vunpack.c.l.b16 %v1811
      %v1887 = vunpack.c.l.b16 %v1825
      %v1888 = vunpack.c.l.b16 %v1839
      %v1889 = vunpack.c.l.b16 %v1853
      %v1890 = vunpack.c.l.b16 %v1867
      %v1891 = vunpack.c.l.b16 %v1881
      %v1892 = vpack.c.b16 %v1885, %v1884
      %v1893 = vpack.c.b16 %v1887, %v1886
      %v1894 = vpack.c.b16 %v1889, %v1888
      %v1895 = vpack.c.b16 %v1891, %v1890
      %v1897 = vsel %vm786, %v1892, 0
      %v1900 = vsel %vm786, %v1893, 0
      %v1903 = vsel %vm786, %v1894, 0
      %v1906 = vsel %vm786, %v1895, 0
      %v1909 = vsel %vm799, %v1883, 0
      %1911 = vmatprep.subr.bf16.mxu0 0
      %1912 = vmatpush1.bf16.msra.mxu0 0
      %1913 = vmatprep.subr.bf16.mxu0 0
      %1914 = vmatpush1.bf16.msra.mxu0 0
      %1915 = vmatprep.subr.bf16.mxu0 0
      %1916 = vmatpush1.bf16.msra.mxu0 0
      %1917 = vmatprep.subr.bf16.mxu0 0
      %1918 = vmatpush1.bf16.msra.mxu0 0
      %1919 = vmatprep.subr.bf16.mxu0 0
      %1920 = vmatpush1.bf16.msra.mxu0 0
      %1921 = vmatprep.subr.bf16.mxu0 0
      %1922 = vmatpush1.bf16.msra.mxu0 0
      %1923 = vmatprep.subr.bf16.mxu0 0
      %1924 = vmatpush1.bf16.msra.mxu0 0
      %1925 = vmatprep.subr.bf16.mxu0 0
      %1926 = vmatpush1.bf16.msra.mxu0 %v1909
      %1927 = vmatprep.subr.bf16.mxu0 0
      %1928 = vmatpush2.bf16.msra.mxu0 0
      %1929 = vmatprep.subr.bf16.mxu0 0
      %1930 = vmatpush2.bf16.msra.mxu0 0
      %1931 = vmatprep.subr.bf16.mxu0 0
      %1932 = vmatpush2.bf16.msra.mxu0 0
      %1933 = vmatprep.subr.bf16.mxu0 0
      %1934 = vmatpush2.bf16.msra.mxu0 0
      %1935 = vmatprep.subr.bf16.mxu0 0
      %1936 = vmatpush2.bf16.msra.mxu0 0
      %1937 = vmatprep.subr.bf16.mxu0 0
      %1938 = vmatpush2.bf16.msra.mxu0 0
      %1939 = vmatprep.subr.bf16.mxu0 0
      %1940 = vmatpush2.bf16.msra.mxu0 0
      %1941 = vmatprep.subr.bf16.mxu0 0
      %1942 = vmatpush2.bf16.msra.mxu0 0
      %1943 = vmatprep.mubr.bf16.mxu0 0
      %1944 = vmatmul.mubr.bf16.gmra.mxu0 %v1897
      %v1945 = vpop.f32.mrf.mxu0
      %v1946 = vadd.f32 0.0, %v1945
      %v1947 = vpop.f32.mrf.mxu0
      %v1948 = vpop.f32.mrf.mxu0
      %v1949 = vadd.f32 0.0, %v1948
      %v1950 = vpop.f32.mrf.mxu0
      %1951 = vmatprep.mubr.bf16.mxu0 0
      %1952 = vmatmul.mubr.bf16.gmra.mxu0 %v1900
      %v1953 = vpop.f32.mrf.mxu0
      %v1954 = vadd.f32 0.0, %v1953
      %v1955 = vpop.f32.mrf.mxu0
      %v1956 = vpop.f32.mrf.mxu0
      %v1957 = vadd.f32 0.0, %v1956
      %v1958 = vpop.f32.mrf.mxu0
      %1959 = vmatprep.mubr.bf16.mxu0 0
      %1960 = vmatmul.mubr.bf16.gmra.mxu0 %v1903
      %v1961 = vpop.f32.mrf.mxu0
      %v1962 = vadd.f32 0.0, %v1961
      %v1963 = vpop.f32.mrf.mxu0
      %v1964 = vpop.f32.mrf.mxu0
      %v1965 = vadd.f32 0.0, %v1964
      %v1966 = vpop.f32.mrf.mxu0
      %1967 = vmatprep.mubr.bf16.mxu0 0
      %1968 = vmatmul.mubr.bf16.gmra.mxu0 %v1906
      %v1969 = vpop.f32.mrf.mxu0
      %v1970 = vadd.f32 0.0, %v1969
      %v1971 = vpop.f32.mrf.mxu0
      %v1972 = vpop.f32.mrf.mxu0
      %v1973 = vadd.f32 0.0, %v1972
      %v1974 = vpop.f32.mrf.mxu0
      %1975 = vdwg.mxu0
      %v1976 = vadd.f32 %v1746, %v1946
      %v1977 = vadd.f32 %v1747, %v1949
      %v1978 = vadd.f32 %v1748, %v1954
      %v1979 = vadd.f32 %v1749, %v1957
      %v1980 = vadd.f32 %v1750, %v1962
      %v1981 = vadd.f32 %v1751, %v1965
      %v1982 = vadd.f32 %v1752, %v1970
      %v1983 = vadd.f32 %v1753, %v1973
      %v1984 = vld [vmem:[%s1635] sm:$0xe]
      %v1985 = vld [vmem:[%s1635 + $0x8] sm:$0xe]
      %v1986 = vld [vmem:[%s1635 + $0x10] sm:$0xe]
      %v1987 = vld [vmem:[%s1635 + $0x18] sm:$0xe]
      %v1988 = vld [vmem:[%s1635 + $0x20] sm:$0xe]
      %v1989 = vld [vmem:[%s1635 + $0x28] sm:$0xe]
      %v1990 = vld [vmem:[%s1635 + $0x30] sm:$0xe]
      %v1991 = vld [vmem:[%s1635 + $0x38] sm:$0xe]
      %v2008 = vrot.slane %v1984, 5
      %v2009 = vrot.slane %v2008, 4
      %v2010 = vrot.slane %v1755, 5
      %v2011 = vsel %vm994, %v2009, %v2010
      %v2012 = vrot.slane %v1985, 5
      %v2013 = vrot.slane %v2012, 4
      %v2014 = vrot.slane %v1757, 5
      %v2015 = vsel %vm994, %v2013, %v2014
      %v2016 = vrot.slane %v1986, 5
      %v2017 = vrot.slane %v2016, 4
      %v2018 = vrot.slane %v1759, 5
      %v2019 = vsel %vm994, %v2017, %v2018
      %v2020 = vrot.slane %v1987, 5
      %v2021 = vrot.slane %v2020, 4
      %v2022 = vrot.slane %v1761, 5
      %v2023 = vsel %vm994, %v2021, %v2022
      %v2024 = vrot.slane %v1988, 5
      %v2025 = vrot.slane %v2024, 4
      %v2026 = vrot.slane %v1763, 5
      %v2027 = vsel %vm994, %v2025, %v2026
      %v2028 = vrot.slane %v1989, 5
      %v2029 = vrot.slane %v2028, 4
      %v2030 = vrot.slane %v1765, 5
      %v2031 = vsel %vm994, %v2029, %v2030
      %v2032 = vrot.slane %v1990, 5
      %v2033 = vrot.slane %v2032, 4
      %v2034 = vrot.slane %v1767, 5
      %v2035 = vsel %vm994, %v2033, %v2034
      %v2036 = vrot.slane %v1991, 5
      %v2037 = vrot.slane %v2036, 4
      %v2038 = vrot.slane %v1769, 5
      %v2039 = vsel %vm994, %v2037, %v2038
      %s2040 = scalar_lea.vmem %s3, 32
      %v2041 = vld [vmem:[%s2040] sm:$0xf]
      %v2042 = vunpack.c.l.b16 %v2011
      %v2043 = vunpack.c.l.b16 %v2015
      %v2044 = vunpack.c.l.b16 %v2019
      %v2045 = vunpack.c.l.b16 %v2023
      %v2046 = vunpack.c.l.b16 %v2027
      %v2047 = vunpack.c.l.b16 %v2031
      %v2048 = vunpack.c.l.b16 %v2035
      %v2049 = vunpack.c.l.b16 %v2039
      %v2050 = vpack.c.b16 %v2043, %v2042
      %v2051 = vpack.c.b16 %v2045, %v2044
      %v2052 = vpack.c.b16 %v2047, %v2046
      %v2053 = vpack.c.b16 %v2049, %v2048
      %v2055 = vsel %vm786, %v2050, 0
      %v2058 = vsel %vm786, %v2051, 0
      %v2061 = vsel %vm786, %v2052, 0
      %v2064 = vsel %vm786, %v2053, 0
      %v2067 = vsel %vm799, %v2041, 0
      %2069 = vmatprep.subr.bf16.mxu0 0
      %2070 = vmatpush1.bf16.msra.mxu0 0
      %2071 = vmatprep.subr.bf16.mxu0 0
      %2072 = vmatpush1.bf16.msra.mxu0 0
      %2073 = vmatprep.subr.bf16.mxu0 0
      %2074 = vmatpush1.bf16.msra.mxu0 0
      %2075 = vmatprep.subr.bf16.mxu0 0
      %2076 = vmatpush1.bf16.msra.mxu0 0
      %2077 = vmatprep.subr.bf16.mxu0 0
      %2078 = vmatpush1.bf16.msra.mxu0 0
      %2079 = vmatprep.subr.bf16.mxu0 0
      %2080 = vmatpush1.bf16.msra.mxu0 0
      %2081 = vmatprep.subr.bf16.mxu0 0
      %2082 = vmatpush1.bf16.msra.mxu0 0
      %2083 = vmatprep.subr.bf16.mxu0 0
      %2084 = vmatpush1.bf16.msra.mxu0 %v2067
      %2085 = vmatprep.subr.bf16.mxu0 0
      %2086 = vmatpush2.bf16.msra.mxu0 0
      %2087 = vmatprep.subr.bf16.mxu0 0
      %2088 = vmatpush2.bf16.msra.mxu0 0
      %2089 = vmatprep.subr.bf16.mxu0 0
      %2090 = vmatpush2.bf16.msra.mxu0 0
      %2091 = vmatprep.subr.bf16.mxu0 0
      %2092 = vmatpush2.bf16.msra.mxu0 0
      %2093 = vmatprep.subr.bf16.mxu0 0
      %2094 = vmatpush2.bf16.msra.mxu0 0
      %2095 = vmatprep.subr.bf16.mxu0 0
      %2096 = vmatpush2.bf16.msra.mxu0 0
      %2097 = vmatprep.subr.bf16.mxu0 0
      %2098 = vmatpush2.bf16.msra.mxu0 0
      %2099 = vmatprep.subr.bf16.mxu0 0
      %2100 = vmatpush2.bf16.msra.mxu0 0
      %2101 = vmatprep.mubr.bf16.mxu0 0
      %2102 = vmatmul.mubr.bf16.gmra.mxu0 %v2055
      %v2103 = vpop.f32.mrf.mxu0
      %v2104 = vadd.f32 0.0, %v2103
      %v2105 = vpop.f32.mrf.mxu0
      %v2106 = vpop.f32.mrf.mxu0
      %v2107 = vadd.f32 0.0, %v2106
      %v2108 = vpop.f32.mrf.mxu0
      %2109 = vmatprep.mubr.bf16.mxu0 0
      %2110 = vmatmul.mubr.bf16.gmra.mxu0 %v2058
      %v2111 = vpop.f32.mrf.mxu0
      %v2112 = vadd.f32 0.0, %v2111
      %v2113 = vpop.f32.mrf.mxu0
      %v2114 = vpop.f32.mrf.mxu0
      %v2115 = vadd.f32 0.0, %v2114
      %v2116 = vpop.f32.mrf.mxu0
      %2117 = vmatprep.mubr.bf16.mxu0 0
      %2118 = vmatmul.mubr.bf16.gmra.mxu0 %v2061
      %v2119 = vpop.f32.mrf.mxu0
      %v2120 = vadd.f32 0.0, %v2119
      %v2121 = vpop.f32.mrf.mxu0
      %v2122 = vpop.f32.mrf.mxu0
      %v2123 = vadd.f32 0.0, %v2122
      %v2124 = vpop.f32.mrf.mxu0
      %2125 = vmatprep.mubr.bf16.mxu0 0
      %2126 = vmatmul.mubr.bf16.gmra.mxu0 %v2064
      %v2127 = vpop.f32.mrf.mxu0
      %v2128 = vadd.f32 0.0, %v2127
      %v2129 = vpop.f32.mrf.mxu0
      %v2130 = vpop.f32.mrf.mxu0
      %v2131 = vadd.f32 0.0, %v2130
      %v2132 = vpop.f32.mrf.mxu0
      %2133 = vdwg.mxu0
      %v2134 = vadd.f32 %v1976, %v2104
      %v2135 = vadd.f32 %v1977, %v2107
      %v2136 = vadd.f32 %v1978, %v2112
      %v2137 = vadd.f32 %v1979, %v2115
      %v2138 = vadd.f32 %v1980, %v2120
      %v2139 = vadd.f32 %v1981, %v2123
      %v2140 = vadd.f32 %v1982, %v2128
      %v2141 = vadd.f32 %v1983, %v2131
      %v2142 = vld [vmem:[%s4] sm:$0x1]
      %v2144 = vlaneseq
      %v2145 = vshrl.u32 %v2144, 7
      %v2146 = vsub.s32 0, %v2145
      %v2147 = vrot.slane %v2142, %v2146
      %v2149 = vadd.f32 %v2134, %v2147
      %v2150 = vadd.f32 %v2135, %v2147
      %v2151 = vadd.f32 %v2136, %v2147
      %v2152 = vadd.f32 %v2137, %v2147
      %v2153 = vadd.f32 %v2138, %v2147
      %v2154 = vadd.f32 %v2139, %v2147
      %v2155 = vadd.f32 %v2140, %v2147
      %v2156 = vadd.f32 %v2141, %v2147
      %v2157 = vmax.f32 %v2149, 0.0
      %v2158 = vmax.f32 %v2150, 0.0
      %v2159 = vmax.f32 %v2151, 0.0
      %v2160 = vmax.f32 %v2152, 0.0
      %v2161 = vmax.f32 %v2153, 0.0
      %v2162 = vmax.f32 %v2154, 0.0
      %v2163 = vmax.f32 %v2155, 0.0
      %v2164 = vmax.f32 %v2156, 0.0
      %v2165 = vpack.c.bf16 %v2158, %v2157
      %v2166 = vpack.c.bf16 %v2160, %v2159
      %v2167 = vpack.c.bf16 %v2162, %v2161
      %v2168 = vpack.c.bf16 %v2164, %v2163
      %v2169 = vld [vmem:[%s5] sm:$0xf]
      %v2170 = vld [vmem:[%s6] sm:$0x1]
      %v2172 = vlaneseq
      %v2173 = vshrl.u32 %v2172, 7
      %v2174 = vsub.s32 0, %v2173
      %v2175 = vrot.slane %v2170, %v2174
      %v2178 = vsel %vm786, %v2165, 0
      %v2181 = vsel %vm786, %v2166, 0
      %v2184 = vsel %vm786, %v2167, 0
      %v2187 = vsel %vm786, %v2168, 0
      %v2190 = vsel %vm799, %v2169, 0
      %2192 = vmatprep.subr.bf16.mxu0 0
      %2193 = vmatpush1.bf16.msra.mxu0 0
      %2194 = vmatprep.subr.bf16.mxu0 0
      %2195 = vmatpush1.bf16.msra.mxu0 0
      %2196 = vmatprep.subr.bf16.mxu0 0
      %2197 = vmatpush1.bf16.msra.mxu0 0
      %2198 = vmatprep.subr.bf16.mxu0 0
      %2199 = vmatpush1.bf16.msra.mxu0 0
      %2200 = vmatprep.subr.bf16.mxu0 0
      %2201 = vmatpush1.bf16.msra.mxu0 0
      %2202 = vmatprep.subr.bf16.mxu0 0
      %2203 = vmatpush1.bf16.msra.mxu0 0
      %2204 = vmatprep.subr.bf16.mxu0 0
      %2205 = vmatpush1.bf16.msra.mxu0 0
      %2206 = vmatprep.subr.bf16.mxu0 0
      %2207 = vmatpush1.bf16.msra.mxu0 %v2190
      %2208 = vmatprep.subr.bf16.mxu0 0
      %2209 = vmatpush2.bf16.msra.mxu0 0
      %2210 = vmatprep.subr.bf16.mxu0 0
      %2211 = vmatpush2.bf16.msra.mxu0 0
      %2212 = vmatprep.subr.bf16.mxu0 0
      %2213 = vmatpush2.bf16.msra.mxu0 0
      %2214 = vmatprep.subr.bf16.mxu0 0
      %2215 = vmatpush2.bf16.msra.mxu0 0
      %2216 = vmatprep.subr.bf16.mxu0 0
      %2217 = vmatpush2.bf16.msra.mxu0 0
      %2218 = vmatprep.subr.bf16.mxu0 0
      %2219 = vmatpush2.bf16.msra.mxu0 0
      %2220 = vmatprep.subr.bf16.mxu0 0
      %2221 = vmatpush2.bf16.msra.mxu0 0
      %2222 = vmatprep.subr.bf16.mxu0 0
      %2223 = vmatpush2.bf16.msra.mxu0 0
      %2224 = vmatprep.mubr.bf16.mxu0 0
      %2225 = vmatmul.mubr.bf16.gmra.mxu0 %v2178
      %v2226 = vpop.f32.mrf.mxu0
      %v2227 = vadd.f32 %v2175, %v2226
      %v2228 = vpop.f32.mrf.mxu0
      %v2229 = vpop.f32.mrf.mxu0
      %v2230 = vadd.f32 %v2175, %v2229
      %v2231 = vpop.f32.mrf.mxu0
      %2232 = vmatprep.mubr.bf16.mxu0 0
      %2233 = vmatmul.mubr.bf16.gmra.mxu0 %v2181
      %v2234 = vpop.f32.mrf.mxu0
      %v2235 = vadd.f32 %v2175, %v2234
      %v2236 = vpop.f32.mrf.mxu0
      %v2237 = vpop.f32.mrf.mxu0
      %v2238 = vadd.f32 %v2175, %v2237
      %v2239 = vpop.f32.mrf.mxu0
      %2240 = vmatprep.mubr.bf16.mxu0 0
      %2241 = vmatmul.mubr.bf16.gmra.mxu0 %v2184
      %v2242 = vpop.f32.mrf.mxu0
      %v2243 = vadd.f32 %v2175, %v2242
      %v2244 = vpop.f32.mrf.mxu0
      %v2245 = vpop.f32.mrf.mxu0
      %v2246 = vadd.f32 %v2175, %v2245
      %v2247 = vpop.f32.mrf.mxu0
      %2248 = vmatprep.mubr.bf16.mxu0 0
      %2249 = vmatmul.mubr.bf16.gmra.mxu0 %v2187
      %v2250 = vpop.f32.mrf.mxu0
      %v2251 = vadd.f32 %v2175, %v2250
      %v2252 = vpop.f32.mrf.mxu0
      %v2253 = vpop.f32.mrf.mxu0
      %v2254 = vadd.f32 %v2175, %v2253
      %v2255 = vpop.f32.mrf.mxu0
      %2256 = vdwg.mxu0
      %v2257 = vunpack.c.l.bf16 %v280
      %v2258 = vunpack.c.l.bf16 %v281
      %v2259 = vunpack.c.l.bf16 %v282
      %v2260 = vunpack.c.l.bf16 %v283
      %v2261 = vunpack.c.l.bf16 %v284
      %v2262 = vunpack.c.l.bf16 %v285
      %v2263 = vunpack.c.l.bf16 %v286
      %v2264 = vunpack.c.l.bf16 %v287
      %v2265 = vadd.f32 %v2227, %v2257
      %v2266 = vadd.f32 %v2230, %v2258
      %v2267 = vadd.f32 %v2235, %v2259
      %v2268 = vadd.f32 %v2238, %v2260
      %v2269 = vadd.f32 %v2243, %v2261
      %v2270 = vadd.f32 %v2246, %v2262
      %v2271 = vadd.f32 %v2251, %v2263
      %v2272 = vadd.f32 %v2254, %v2264
      %v2273 = vmax.f32 %v2265, 0.0
      %v2274 = vmax.f32 %v2266, 0.0
      %v2275 = vmax.f32 %v2267, 0.0
      %v2276 = vmax.f32 %v2268, 0.0
      %v2277 = vmax.f32 %v2269, 0.0
      %v2278 = vmax.f32 %v2270, 0.0
      %v2279 = vmax.f32 %v2271, 0.0
      %v2280 = vmax.f32 %v2272, 0.0
      %v2281 = vpack.c.bf16 %v2274, %v2273
      %v2282 = vpack.c.bf16 %v2276, %v2275
      %v2283 = vpack.c.bf16 %v2278, %v2277
      %v2284 = vpack.c.bf16 %v2280, %v2279
      %v2289 = vunpack.c.l.b16 %v2281
      %v2290 = vunpack.c.h.b16 %v2281
      %v2291 = vunpack.c.l.b16 %v2282
      %v2292 = vunpack.c.h.b16 %v2282
      %v2293 = vunpack.c.l.b16 %v2283
      %v2294 = vunpack.c.h.b16 %v2283
      %v2295 = vunpack.c.l.b16 %v2284
      %v2296 = vunpack.c.h.b16 %v2284
      %v2297 = vpack.c.b16 %v2289, %v2289
      %v2298 = vpack.c.b16 %v2290, %v2290
      %v2299 = vpack.c.b16 %v2291, %v2291
      %v2300 = vpack.c.b16 %v2292, %v2292
      %v2301 = vpack.c.b16 %v2293, %v2293
      %v2302 = vpack.c.b16 %v2294, %v2294
      %v2303 = vpack.c.b16 %v2295, %v2295
      %v2304 = vpack.c.b16 %v2296, %v2296
      %vm2313 = vcmask 257024
      %2314 = vst.msk [vmem:[%s278] sm:$0xf] %vm2313, %v2297
      %2315 = vst.msk [vmem:[%s278 + $0x4] sm:$0xf] %vm2313, %v2298
      %2316 = vst.msk [vmem:[%s278 + $0x8] sm:$0xf] %vm2313, %v2299
      %2317 = vst.msk [vmem:[%s278 + $0xc] sm:$0xf] %vm2313, %v2300
      %2318 = vst.msk [vmem:[%s278 + $0x10] sm:$0xf] %vm2313, %v2301
      %2319 = vst.msk [vmem:[%s278 + $0x14] sm:$0xf] %vm2313, %v2302
      %2320 = vst.msk [vmem:[%s278 + $0x18] sm:$0xf] %vm2313, %v2303
      %2321 = vst.msk [vmem:[%s278 + $0x1c] sm:$0xf] %vm2313, %v2304
      %p2322 = scmp.lt.s32.totalorder %s18, 1
      %s2323 = scalar_select %p2322, %s18, 1
      %s2324 = smul.addr %s2323, 8
      %s2325 = smul.addr %s2324, 4
      %s2326 = scalar_lea.vmem %s7, %s2325
      // Predicated region
      $region49: #{tpu_custom_call.1} parent=47 // pred_check
        %p2327 = pneg %p188
      $region50: #{tpu_custom_call.1} parent=47 // pred_check_branch
        %2329 = sbr.rel (%p2327) target = $region52
      $region51: #{tpu_custom_call.1} parent=47 // pred_region
        _
      $region52: #{tpu_custom_call.1} parent=47 // pred_fallthru
        _
    $region48: #{tpu_custom_call.1} parent=5 // pred_fallthru
      _
    %p2330 = scmp.le.s32.totalorder 2, %s13
    // Predicated region
    $region53: #{tpu_custom_call.1} parent=5 // pred_check
      %p2331 = pneg %p2330
    $region54: #{tpu_custom_call.1} parent=5 // pred_check_branch
      %2333 = sbr.rel (%p2331) target = $region56
    $region55: #{tpu_custom_call.1} parent=5 // pred_region
      %s2334 = ssub.s32 %s13, 2
      // Predicated region
      $region57: #{tpu_custom_call.1} parent=55 // pred_check
        %p2335 = pneg %p194
      $region58: #{tpu_custom_call.1} parent=55 // pred_check_branch
        %2337 = sbr.rel (%p2335) target = $region60
      $region59: #{tpu_custom_call.1} parent=55 // pred_region
        %p2338 = scmp.lt.s32.totalorder %s19, 1
        %s2339 = scalar_select %p2338, %s19, 1
        %s2340 = smul.addr %s2339, 8
        %s2341 = smul.addr %s2340, 4
        %s2342 = scalar_lea.vmem %s7, %s2341
      $region60: #{tpu_custom_call.1} parent=55 // pred_fallthru
        _
    $region56: #{tpu_custom_call.1} parent=5 // pred_fallthru
      _
  $region6: #{tpu_custom_call.1} parent=0 // loop_footer
    %s17 = sadd.s32 1, %s13
  $region7: #{tpu_custom_call.1} parent=0 // loop_footer_branch
    %12 = sbr.rel target = $region3
  $region8: #{tpu_custom_call.1} parent=0 // loop_exit
    _

</llo_original>
